<compile_context>
chip_gen: v7x
topology: tpu7x:2x2x1
jax: 0.10.0
libtpu: 0.0.40
codegen_flags: <defaults>
</compile_context>

<pallas_src>
import functools

import numpy as np

import jax
import jax.numpy as jnp
from jax.experimental import pallas as pl
from jax.experimental.pallas import tpu as pltpu


def _round_up(x, m):
    return ((x + m - 1) // m) * m


def _device_kind():
    try:
        return jax.devices()[0].device_kind.lower()
    except Exception:
        return ""


def _has_bf16_eup():
    # v6e / v7x have bf16 EUP & VPU; on v5e and older bf16 exp only adds casts.
    k = _device_kind()
    return ("v6" in k) or ("v7" in k) or ("7x" in k)


def _vmem_capacity_bytes():
    try:
        cap = getattr(pltpu.get_tpu_info(), "vmem_capacity_bytes", None)
        if cap:
            return int(cap)
    except Exception:
        pass
    k = _device_kind()
    if ("v7" in k) or ("7x" in k):
        return 64 * 1024 * 1024
    if ("v5" in k) or ("v6" in k):
        return 128 * 1024 * 1024
    return 64 * 1024 * 1024  # conservative fallback


# ---------------------------------------------------------------------------
# Kernels
# ---------------------------------------------------------------------------

def mos_head_single_pass_kernel(x_ref, wlat_ref, blat_ref, wdec_ref, bdec_ref,
                                wred_ref, bred_ref,
                                prob_ref, mulv_ref, acc_sc,
                                *, n_experts, ninp, approx_recip, exp_dtype):
    """Grid = (token_tiles,).  Full vocab + decoder weight resident in VMEM:
    exact per-expert softmax, mixture accumulated into a VMEM f32 scratch."""
    k1 = n_experts - 1
    xf = x_ref[...]                                              # (tm, nhid) f32

    # mu / logvar head kept in f32 (tiny matmul; keeps pis / KL-style uses tight)
    mulv = (jnp.dot(xf, wred_ref[...], preferred_element_type=jnp.float32)
            + bred_ref[...])                                     # (tm, 2*k1)
    mulv_ref[...] = mulv

    # stick-breaking mixture weights (eval mode: z = mu)
    vs = jax.nn.sigmoid(mulv[:, :k1])
    pis = []
    remaining = jnp.ones((xf.shape[0], 1), jnp.float32)
    for e in range(k1):
        v = vs[:, e:e + 1]
        pis.append(remaining * v)
        remaining = remaining * (1.0 - v)
    pis.append(remaining)                                        # pis_{K-1}

    # all expert latents from ONE wide MXU matmul
    xc = xf.astype(wlat_ref.dtype)
    h = jnp.tanh(jnp.dot(xc, wlat_ref[...],
                         preferred_element_type=jnp.float32)
                 + blat_ref[...])                                # (tm, E*ninp) f32

    wdec = wdec_ref[...]                                         # (ninp, T) resident
    bdec = bdec_ref[...]                                         # (1, T) f32
    acc_sc[...] = jnp.zeros_like(acc_sc)
    for e in range(n_experts):
        # lane-offset slice happens once per expert per token tile only
        h_e = h[:, e * ninp:(e + 1) * ninp].astype(wdec.dtype)
        logit = (jnp.dot(h_e, wdec, preferred_element_type=jnp.float32)
                 + bdec)                                         # (tm, T) f32
        m = jnp.max(logit, axis=-1, keepdims=True)
        p = jnp.exp((logit - m).astype(exp_dtype)).astype(jnp.float32)
        l = jnp.sum(p, axis=-1, keepdims=True)
        coef = pis[e] * pl.reciprocal(l, approx=approx_recip)    # (tm, 1)
        acc_sc[...] += p * coef
    prob_ref[...] = acc_sc[...].astype(prob_ref.dtype)


def mos_head_two_pass_kernel(x_ref, wlat_ref, blat_ref, wdec_ref, bdec_ref,
                             wred_ref, bred_ref,
                             prob_ref, mulv_ref,
                             h_sc, pis_sc, m_sc, l_sc,
                             *, n_experts, ninp, approx_recip, exp_dtype):
    """Grid = (token_tiles, 2 phases, vocab_tiles).  Streamed-vocab fallback.

    Phase 0: per-expert online max / sum-exp over streamed vocab tiles.
    Phase 1: normalized, mixture-weighted probability tiles.
    All experts share ONE fused MXU matmul per (phase, vocab tile)."""
    phase = pl.program_id(1)
    j = pl.program_id(2)
    k1 = n_experts - 1
    tm = x_ref.shape[0]
    tn = wdec_ref.shape[1]

    # ---- once per token tile: reduce head, mixture weights, latents --------
    @pl.when(jnp.logical_and(phase == 0, j == 0))
    def _init():
        xf = x_ref[...]
        mulv = (jnp.dot(xf, wred_ref[...], preferred_element_type=jnp.float32)
                + bred_ref[...])
        mulv_ref[...] = mulv

        vs = jax.nn.sigmoid(mulv[:, :k1])
        remaining = jnp.ones((tm, 1), jnp.float32)
        for e in range(k1):
            v = vs[:, e:e + 1]
            pis_sc[e] = remaining * v
            remaining = remaining * (1.0 - v)
        pis_sc[k1] = remaining

        xc = xf.astype(wlat_ref.dtype)
        h = jnp.tanh(jnp.dot(xc, wlat_ref[...],
                             preferred_element_type=jnp.float32)
                     + blat_ref[...])                            # (tm, E*ninp)
        # cache latents expert-major (one sublane slab per expert) so the hot
        # loop never slices the lane axis at non-128-aligned offsets
        for e in range(n_experts):
            h_sc[pl.ds(e * tm, tm), :] = (
                h[:, e * ninp:(e + 1) * ninp].astype(h_sc.dtype))

        m_sc[...] = jnp.full(m_sc.shape, -jnp.inf, dtype=jnp.float32)
        l_sc[...] = jnp.zeros(l_sc.shape, dtype=jnp.float32)

    # ---- one fused MXU matmul for ALL experts against this vocab tile ------
    wdec = wdec_ref[...]                                         # (ninp, tn)
    bdec = bdec_ref[...]                                         # (1, tn) f32
    logit = (jnp.dot(h_sc[...], wdec, preferred_element_type=jnp.float32)
             + bdec).reshape(n_experts, tm, tn)                  # (E, tm, tn)

    # ---- phase 0: per-expert running max / sum-exp over the vocab ----------
    @pl.when(phase == 0)
    def _stats():
        m_old = m_sc[...]                                        # (E, tm, 1)
        m_new = jnp.maximum(m_old, jnp.max(logit, axis=-1, keepdims=True))
        p = jnp.exp((logit - m_new).astype(exp_dtype)).astype(jnp.float32)
        l_sc[...] = (l_sc[...] * jnp.exp(m_old - m_new)
                     + jnp.sum(p, axis=-1, keepdims=True))
        m_sc[...] = m_new

    # ---- phase 1: emit normalized, mixture-weighted tile -------------------
    @pl.when(phase == 1)
    def _emit():
        coef = pis_sc[...] * pl.reciprocal(l_sc[...], approx=approx_recip)
        p = jnp.exp((logit - m_sc[...]).astype(exp_dtype)).astype(jnp.float32)
        prob_ref[...] = jnp.sum(p * coef, axis=0).astype(prob_ref.dtype)


# ---------------------------------------------------------------------------
# pallas_call wrappers
# ---------------------------------------------------------------------------

def _single_pass_call(x, w_lat, b_lat, w_dec, b_dec, w_red, b_red, *,
                      n_experts, ninp, tm, prob_dtype, exp_dtype,
                      approx_recip, vmem_limit):
    n_pad, nhidlast = x.shape
    t_pad = w_dec.shape[1]
    k1 = n_experts - 1
    kernel = functools.partial(mos_head_single_pass_kernel,
                               n_experts=n_experts, ninp=ninp,
                               approx_recip=approx_recip, exp_dtype=exp_dtype)

    def inv(shape):
        return pl.BlockSpec(shape, lambda i: (0, 0))

    return pl.pallas_call(
        kernel,
        out_shape=(
            jax.ShapeDtypeStruct((n_pad, t_pad), prob_dtype),
            jax.ShapeDtypeStruct((n_pad, 2 * k1), jnp.float32),
        ),
        grid_spec=pltpu.PrefetchScalarGridSpec(
            num_scalar_prefetch=0,
            grid=(n_pad // tm,),
            in_specs=[
                pl.BlockSpec((tm, nhidlast), lambda i: (i, 0)),     # x (f32)
                inv((nhidlast, n_experts * ninp)),                  # w_lat
                inv((1, n_experts * ninp)),                         # b_lat
                inv((ninp, t_pad)),                                 # w_dec (resident)
                inv((1, t_pad)),                                    # b_dec (resident)
                inv((nhidlast, 2 * k1)),                            # w_red (f32)
                inv((1, 2 * k1)),                                   # b_red
            ],
            out_specs=[
                pl.BlockSpec((tm, t_pad), lambda i: (i, 0)),        # prob
                pl.BlockSpec((tm, 2 * k1), lambda i: (i, 0)),       # [mu | logvar]
            ],
            scratch_shapes=[pltpu.VMEM((tm, t_pad), jnp.float32)],  # acc
        ),
        compiler_params=pltpu.CompilerParams(
            dimension_semantics=("parallel",),
            vmem_limit_bytes=int(vmem_limit)),
    )(x, w_lat, b_lat, w_dec, b_dec, w_red, b_red)


def _two_pass_call(x, w_lat, b_lat, w_dec, b_dec, w_red, b_red, *,
                   n_experts, ninp, tm, tn, prob_dtype, exp_dtype,
                   approx_recip, vmem_limit):
    n_pad, nhidlast = x.shape
    t_pad = w_dec.shape[1]
    k1 = n_experts - 1
    kernel = functools.partial(mos_head_two_pass_kernel,
                               n_experts=n_experts, ninp=ninp,
                               approx_recip=approx_recip, exp_dtype=exp_dtype)

    def inv(shape):
        return pl.BlockSpec(shape, lambda i, p, j: (0, 0))

    return pl.pallas_call(
        kernel,
        out_shape=(
            jax.ShapeDtypeStruct((n_pad, t_pad), prob_dtype),
            jax.ShapeDtypeStruct((n_pad, 2 * k1), jnp.float32),
        ),
        grid_spec=pltpu.PrefetchScalarGridSpec(
            num_scalar_prefetch=0,
            grid=(n_pad // tm, 2, t_pad // tn),
            in_specs=[
                pl.BlockSpec((tm, nhidlast), lambda i, p, j: (i, 0)),   # x (f32)
                inv((nhidlast, n_experts * ninp)),                      # w_lat
                inv((1, n_experts * ninp)),                             # b_lat
                pl.BlockSpec((ninp, tn), lambda i, p, j: (0, j)),       # w_dec (streamed)
                pl.BlockSpec((1, tn), lambda i, p, j: (0, j)),          # b_dec (streamed)
                inv((nhidlast, 2 * k1)),                                # w_red (f32)
                inv((1, 2 * k1)),                                       # b_red
            ],
            out_specs=[
                # NOTE (fragile but correct): during phase 0 (p==0) the prob
                # block index is pinned to (i, 0).  That block is never
                # written during phase 0, stays resident, and is fully
                # overwritten at phase 1 / j==0 BEFORE the block index first
                # changes, so no stale data is ever cycled back to HBM.
                # Phase 1 then walks (i, j) and writes every tile exactly
                # once.  The multi-vocab-tile test in __main__ covers this.
                pl.BlockSpec((tm, tn), lambda i, p, j: (i, j * p)),
                pl.BlockSpec((tm, 2 * k1), lambda i, p, j: (i, 0)),
            ],
            scratch_shapes=[
                pltpu.VMEM((n_experts * tm, ninp), w_dec.dtype),  # latents, expert-major
                pltpu.VMEM((n_experts, tm, 1), jnp.float32),      # pis
                pltpu.VMEM((n_experts, tm, 1), jnp.float32),      # running max
                pltpu.VMEM((n_experts, tm, 1), jnp.float32),      # running sum-exp
            ],
        ),
        compiler_params=pltpu.CompilerParams(
            dimension_semantics=("parallel", "arbitrary", "arbitrary"),
            vmem_limit_bytes=int(vmem_limit)),
    )(x, w_lat, b_lat, w_dec, b_dec, w_red, b_red)


# ---------------------------------------------------------------------------
# Config selection (generation-aware)
# ---------------------------------------------------------------------------

def _choose_config(N, ntoken, nhidlast, ninp, n_experts, compute_dtype,
                   prob_dtype, tm, tn, force_two_pass):
    phys = _vmem_capacity_bytes()
    big_vmem = phys >= (100 << 20)           # 128 MiB parts (v5e/v6e); v7x is 64 MiB
    vmem_limit = int(max(32 << 20, min(phys * 0.80, 100 << 20)))
    budget = vmem_limit - (6 << 20)          # headroom for compiler scratch

    cb = np.dtype(compute_dtype).itemsize
    pb = np.dtype(prob_dtype).itemsize
    k1 = n_experts - 1
    t_full = _round_up(ntoken, 128)

    if tm is None:
        tm = 512 if big_vmem else 256
        if (not big_vmem) and N > 8:
            # v7x has 2 TensorCores: keep >= 2 tiles on the parallel token axis
            tm = min(tm, _round_up(pl.cdiv(N, 2), 8))
    tm = max(8, _round_up(min(tm, _round_up(N, 8)), 8))

    def single_bytes(tm_):
        return (2 * tm_ * nhidlast * 4                       # x (f32, double-buffered)
                + 2 * nhidlast * n_experts * ninp * cb       # w_lat
                + 2 * ninp * t_full * cb + 2 * t_full * 4    # w_dec / b_dec resident
                + 2 * nhidlast * 2 * k1 * 4                  # w_red
                + 2 * tm_ * t_full * pb                      # prob out
                + tm_ * t_full * 4                           # acc scratch
                + 3 * tm_ * t_full * 4                       # logit / exp temporaries
                + tm_ * n_experts * ninp * 4                 # latent value
                + (2 << 20))

    stream_forced = force_two_pass or (tn is not None and tn < t_full)
    if (not stream_forced) and single_bytes(tm) <= budget:
        return True, tm, t_full, vmem_limit

    if tn is None:
        tn = 2048 if big_vmem else 1024
    tn = max(128, _round_up(min(tn, t_full), 128))

    def stream_bytes(tm_, tn_):
        return (2 * tm_ * nhidlast * 4
                + 2 * nhidlast * n_experts * ninp * cb
                + 2 * ninp * tn_ * cb + 2 * tn_ * 4
                + 2 * nhidlast * 2 * k1 * 4
                + 2 * tm_ * tn_ * pb
                + n_experts * tm_ * ninp * cb                # h_sc (expert-major)
                + 3 * n_experts * tm_ * 128 * 4              # pis / m / l (lane-padded)
                + 3 * n_experts * tm_ * tn_ * 4              # fused logits / exp temps
                + (2 << 20))

    while stream_bytes(tm, tn) > budget and tn > 128:
        tn = max(128, _round_up(tn // 2, 128))
    while stream_bytes(tm, tn) > budget and tm > 8:
        tm = max(8, _round_up(tm // 2, 8))
    return False, tm, tn, vmem_limit


# ---------------------------------------------------------------------------
# Public forward
# ---------------------------------------------------------------------------

def mos_head_forward(x_flat, params, *, n_experts, ninp, tm=None, tn=None,
                     compute_dtype=jnp.bfloat16, prob_dtype=jnp.float32,
                     exp_dtype=None, force_two_pass=False):
    """MoShead forward (eval mode).  Returns (prob, mu, logvar)."""
    N, nhidlast = x_flat.shape
    ntoken = params["w_dec"].shape[1]
    k1 = n_experts - 1
    assert n_experts >= 2
    assert params["w_lat"].shape == (nhidlast, n_experts * ninp)
    assert params["w_red"].shape == (nhidlast, 2 * k1)

    is_bf16 = np.dtype(compute_dtype) == np.dtype(jnp.bfloat16)
    if exp_dtype is None:
        # bf16 exp only on bf16-EUP parts (v6e/v7x); v5e & strict f32 path -> f32
        exp_dtype = jnp.bfloat16 if (is_bf16 and _has_bf16_eup()) else jnp.float32
    approx_recip = is_bf16

    single_pass, tm, tn, vmem_limit = _choose_config(
        N, ntoken, nhidlast, ninp, n_experts, compute_dtype, prob_dtype,
        tm, tn, force_two_pass)

    n_pad = _round_up(N, tm)
    t_pad = _round_up(ntoken, tn)
    # -1e30 padding-bias trick requires an f32 bias and that padded vocab
    # columns never fill an entire tile (reviewer concern #4).
    assert t_pad - ntoken < tn

    x = x_flat.astype(jnp.float32)        # kept f32; cast per-use inside the kernel
    if n_pad != N:
        x = jnp.pad(x, ((0, n_pad - N), (0, 0)))

    w_lat = params["w_lat"].astype(compute_dtype)
    b_lat = params["b_lat"].astype(jnp.float32)
    w_dec = params["w_dec"].astype(compute_dtype)
    b_dec = params["b_dec"].astype(jnp.float32)
    w_red = params["w_red"].astype(jnp.float32)   # mu/logvar head stays f32
    b_red = params["b_red"].astype(jnp.float32)
    if t_pad != ntoken:
        w_dec = jnp.pad(w_dec, ((0, 0), (0, t_pad - ntoken)))
        b_dec = jnp.pad(b_dec, ((0, 0), (0, t_pad - ntoken)),
                        constant_values=-1e30)

    common = dict(n_experts=n_experts, ninp=ninp, tm=tm,
                  prob_dtype=prob_dtype, exp_dtype=exp_dtype,
                  approx_recip=approx_recip, vmem_limit=vmem_limit)
    args = (x, w_lat, b_lat, w_dec, b_dec, w_red, b_red)
    if single_pass:
        prob, mulv = _single_pass_call(*args, **common)
    else:
        prob, mulv = _two_pass_call(*args, tn=tn, **common)

    prob = prob[:N, :ntoken]
    mu = mulv[:N, :k1]
    logvar = mulv[:N, k1:]
    return prob, mu, logvar


# ---------------------------------------------------------------------------
# Pure-JAX reference + params
# ---------------------------------------------------------------------------

def mos_head_ref(x_flat, params, *, n_experts, ninp):
    """Pure-JAX reference mirroring the PyTorch forward (eval mode)."""
    N = x_flat.shape[0]
    ntoken = params["w_dec"].shape[1]
    k1 = n_experts - 1
    mulv = x_flat @ params["w_red"] + params["b_red"][0]
    mu, logvar = mulv[:, :k1], mulv[:, k1:]
    vs = jax.nn.sigmoid(mu)
    vs = jnp.concatenate([vs, jnp.ones((N, 1), jnp.float32)], axis=1)
    R = 1.0 - vs
    R = jnp.concatenate([jnp.ones((N, 1), jnp.float32), R[:, :-1]], axis=1)
    pis = jnp.cumprod(R, axis=1) * vs
    latent = jnp.tanh(x_flat @ params["w_lat"] + params["b_lat"][0])
    logit = latent.reshape(-1, ninp) @ params["w_dec"] + params["b_dec"][0]
    prob = jax.nn.softmax(logit, axis=1).reshape(N, n_experts, ntoken)
    prob = (prob * pis[:, :, None]).sum(1)
    return prob, mu, logvar


def init_params(key, *, ntoken, ninp, nhidlast, n_experts):
    """Deterministic PyTorch-style uniform(-1/sqrt(fan_in), 1/sqrt(fan_in))."""
    ks = jax.random.split(key, 6)

    def lin(kw, kb, fan_in, fan_out):
        bound = 1.0 / jnp.sqrt(fan_in)
        w = jax.random.uniform(kw, (fan_in, fan_out), jnp.float32, -bound, bound)
        b = jax.random.uniform(kb, (1, fan_out), jnp.float32, -bound, bound)
        return w, b

    k1 = n_experts - 1
    w_lat, b_lat = lin(ks[0], ks[1], nhidlast, n_experts * ninp)
    w_dec, b_dec = lin(ks[2], ks[3], ninp, ntoken)
    w_red, b_red = lin(ks[4], ks[5], nhidlast, 2 * k1)     # [mu | logvar]
    return {"w_lat": w_lat, "b_lat": b_lat,
            "w_dec": w_dec, "b_dec": b_dec,
            "w_red": w_red, "b_red": b_red}


if __name__ == "__main__":
    ninp, nhidlast, n_experts, batch = 32, 32, 4, 2
    key = jax.random.PRNGKey(0)
    k_x1, k_p1, k_x2, k_p2 = jax.random.split(key, 4)

    # ---- Case 1: small vocab -> single-pass (resident decoder) path --------
    seq, ntoken = 8, 128
    output = jax.random.normal(k_x1, (seq, batch, nhidlast), jnp.float32)
    params = init_params(k_p1, ntoken=ntoken, ninp=ninp,
                         nhidlast=nhidlast, n_experts=n_experts)
    x_flat = output.reshape(-1, nhidlast)
    prob_r, mu_r, lv_r = mos_head_ref(x_flat, params,
                                      n_experts=n_experts, ninp=ninp)

    # strict f32 path
    prob, mu, logvar = mos_head_forward(x_flat, params, n_experts=n_experts,
                                        ninp=ninp, compute_dtype=jnp.float32)
    jax.block_until_ready((prob, mu, logvar))
    assert jnp.allclose(prob, prob_r, rtol=1e-5, atol=1e-5)
    assert jnp.allclose(mu, mu_r, rtol=1e-5, atol=1e-5)
    assert jnp.allclose(logvar, lv_r, rtol=1e-5, atol=1e-5)
    assert jnp.allclose(prob.sum(axis=1), 1.0, atol=1e-3)

    # bf16 fast path (bf16 compute, bf16 prob output)
    prob_b, mu_b, lv_b = mos_head_forward(x_flat, params, n_experts=n_experts,
                                          ninp=ninp, compute_dtype=jnp.bfloat16,
                                          prob_dtype=jnp.bfloat16)
    jax.block_until_ready((prob_b, mu_b, lv_b))
    prob_b32 = prob_b.astype(jnp.float32)
    assert jnp.allclose(prob_b32, prob_r, rtol=5e-2, atol=5e-3)
    assert jnp.allclose(mu_b, mu_r, rtol=5e-2, atol=5e-2)
    assert jnp.allclose(lv_b, lv_r, rtol=5e-2, atol=5e-2)
    assert jnp.allclose(prob_b32.sum(axis=1), 1.0, atol=2e-2)

    # ---- Case 2: streamed two-pass path (multi vocab tile + padding) -------
    seq2, ntoken2 = 7, 300                      # N=14 (row padding), 3 vocab tiles
    output2 = jax.random.normal(k_x2, (seq2, batch, nhidlast), jnp.float32)
    params2 = init_params(k_p2, ntoken=ntoken2, ninp=ninp,
                          nhidlast=nhidlast, n_experts=n_experts)
    x2 = output2.reshape(-1, nhidlast)
    prob2_r, mu2_r, lv2_r = mos_head_ref(x2, params2,
                                         n_experts=n_experts, ninp=ninp)

    prob2, mu2, lv2 = mos_head_forward(x2, params2, n_experts=n_experts,
                                       ninp=ninp, compute_dtype=jnp.float32,
                                       tn=128, force_two_pass=True)
    jax.block_until_ready((prob2, mu2, lv2))
    assert jnp.allclose(prob2, prob2_r, rtol=1e-5, atol=1e-5)
    assert jnp.allclose(mu2, mu2_r, rtol=1e-5, atol=1e-5)
    assert jnp.allclose(lv2, lv2_r, rtol=1e-5, atol=1e-5)
    assert jnp.allclose(prob2.sum(axis=1), 1.0, atol=1e-3)

    prob2b, mu2b, lv2b = mos_head_forward(x2, params2, n_experts=n_experts,
                                          ninp=ninp, compute_dtype=jnp.bfloat16,
                                          prob_dtype=jnp.bfloat16,
                                          tn=128, force_two_pass=True)
    jax.block_until_ready((prob2b, mu2b, lv2b))
    prob2b32 = prob2b.astype(jnp.float32)
    assert jnp.allclose(prob2b32, prob2_r, rtol=5e-2, atol=5e-3)
    assert jnp.allclose(mu2b, mu2_r, rtol=5e-2, atol=5e-2)
    assert jnp.allclose(lv2b, lv2_r, rtol=5e-2, atol=5e-2)
    assert jnp.allclose(prob2b32.sum(axis=1), 1.0, atol=2e-2)

    print("KERNEL_OK")
</pallas_src>

<mosaic_0001>
module attributes {stable_mosaic.version = 11 : i64} {
  func.func @mos_head_single_pass_kernel(%arg0: i32, %arg1: memref<8x32xf32, #tpu.memory_space<vmem>>, %arg2: memref<32x128xf32, #tpu.memory_space<vmem>>, %arg3: memref<1x128xf32, #tpu.memory_space<vmem>>, %arg4: memref<32x128xf32, #tpu.memory_space<vmem>>, %arg5: memref<1x128xf32, #tpu.memory_space<vmem>>, %arg6: memref<32x6xf32, #tpu.memory_space<vmem>>, %arg7: memref<1x6xf32, #tpu.memory_space<vmem>>, %arg8: memref<8x128xf32, #tpu.memory_space<vmem>>, %arg9: memref<8x6xf32, #tpu.memory_space<vmem>>, %arg10: memref<8x128xf32, #tpu.memory_space<vmem>>) attributes {dimension_semantics = [#tpu.dimension_semantics<parallel>], iteration_bounds = array<i64: 2>, scalar_prefetch = 0 : i64, scratch_operands = 1 : i64, tpu.core_type = #tpu.core_type<tc>, window_params = [{transform_indices = @transform_0, window_bounds = array<i64: 8, 32>}, {pipeline_mode = #tpu.pipeline_mode<synchronous>, transform_indices = @transform_1, window_bounds = array<i64: 32, 128>}, {pipeline_mode = #tpu.pipeline_mode<synchronous>, transform_indices = @transform_2, window_bounds = array<i64: 1, 128>}, {pipeline_mode = #tpu.pipeline_mode<synchronous>, transform_indices = @transform_3, window_bounds = array<i64: 32, 128>}, {pipeline_mode = #tpu.pipeline_mode<synchronous>, transform_indices = @transform_4, window_bounds = array<i64: 1, 128>}, {pipeline_mode = #tpu.pipeline_mode<synchronous>, transform_indices = @transform_5, window_bounds = array<i64: 32, 6>}, {pipeline_mode = #tpu.pipeline_mode<synchronous>, transform_indices = @transform_6, window_bounds = array<i64: 1, 6>}, {transform_indices = @transform_7, window_bounds = array<i64: 8, 128>}, {transform_indices = @transform_8, window_bounds = array<i64: 8, 6>}]} {
    %c0 = arith.constant 0 : index
    %c0_0 = arith.constant 0 : index
    %0 = vector.load %arg1[%c0, %c0_0] : memref<8x32xf32, #tpu.memory_space<vmem>>, vector<8x32xf32>
    %c0_1 = arith.constant 0 : index
    %c0_2 = arith.constant 0 : index
    %1 = vector.load %arg6[%c0_1, %c0_2] : memref<32x6xf32, #tpu.memory_space<vmem>>, vector<32x6xf32>
    %cst = arith.constant dense<0.000000e+00> : vector<8x6xf32>
    %2 = tpu.matmul %0, %1, %cst {dimension_numbers = #tpu.dot_dimension_numbers<[1], [0], [0], [1], [0, 0, 1, 1], [], []>} : vector<8x32xf32>, vector<32x6xf32>, vector<8x6xf32> -> vector<8x6xf32>
    %c0_3 = arith.constant 0 : index
    %c0_4 = arith.constant 0 : index
    %3 = vector.load %arg7[%c0_3, %c0_4] : memref<1x6xf32, #tpu.memory_space<vmem>>, vector<1x6xf32>
    %4 = vector.broadcast %3 : vector<1x6xf32> to vector<8x6xf32>
    %5 = arith.addf %2, %4 : vector<8x6xf32>
    %c0_5 = arith.constant 0 : index
    %c0_6 = arith.constant 0 : index
    %6 = vector.load %arg9[%c0_5, %c0_6] : memref<8x6xf32, #tpu.memory_space<vmem>>, vector<8x6xf32>
    tpu.vector_store %arg9[%c0_5, %c0_6], %5 {strides = array<i32>} : memref<8x6xf32, #tpu.memory_space<vmem>>, vector<8x6xf32>,
    %7 = vector.extract_strided_slice %5 {offsets = [0, 0], sizes = [8, 3], strides = [1, 1]} : vector<8x6xf32> to vector<8x3xf32>
    %8 = arith.negf %7 : vector<8x3xf32>
    %9 = math.exp %8 : vector<8x3xf32>
    %cst_7 = arith.constant 1.000000e+00 : f32
    %10 = vector.broadcast %cst_7 : f32 to vector<8x3xf32>
    %11 = arith.addf %10, %9 : vector<8x3xf32>
    %12 = arith.divf %10, %11 : vector<8x3xf32>
    %cst_8 = arith.constant 1.000000e+00 : f32
    %13 = vector.broadcast %cst_8 : f32 to vector<8x1xf32>
    %14 = vector.extract_strided_slice %12 {offsets = [0, 0], sizes = [8, 1], strides = [1, 1]} : vector<8x3xf32> to vector<8x1xf32>
    %15 = arith.mulf %13, %14 : vector<8x1xf32>
    %cst_9 = arith.constant 1.000000e+00 : f32
    %16 = vector.broadcast %cst_9 : f32 to vector<8x1xf32>
    %17 = arith.subf %16, %14 : vector<8x1xf32>
    %18 = arith.mulf %13, %17 : vector<8x1xf32>
    %19 = vector.extract_strided_slice %12 {offsets = [0, 1], sizes = [8, 1], strides = [1, 1]} : vector<8x3xf32> to vector<8x1xf32>
    %20 = arith.mulf %18, %19 : vector<8x1xf32>
    %cst_10 = arith.constant 1.000000e+00 : f32
    %21 = vector.broadcast %cst_10 : f32 to vector<8x1xf32>
    %22 = arith.subf %21, %19 : vector<8x1xf32>
    %23 = arith.mulf %18, %22 : vector<8x1xf32>
    %24 = vector.extract_strided_slice %12 {offsets = [0, 2], sizes = [8, 1], strides = [1, 1]} : vector<8x3xf32> to vector<8x1xf32>
    %25 = arith.mulf %23, %24 : vector<8x1xf32>
    %cst_11 = arith.constant 1.000000e+00 : f32
    %26 = vector.broadcast %cst_11 : f32 to vector<8x1xf32>
    %27 = arith.subf %26, %24 : vector<8x1xf32>
    %28 = arith.mulf %23, %27 : vector<8x1xf32>
    %c0_12 = arith.constant 0 : index
    %c0_13 = arith.constant 0 : index
    %29 = vector.load %arg2[%c0_12, %c0_13] : memref<32x128xf32, #tpu.memory_space<vmem>>, vector<32x128xf32>
    %cst_14 = arith.constant dense<0.000000e+00> : vector<8x128xf32>
    %30 = tpu.matmul %0, %29, %cst_14 {dimension_numbers = #tpu.dot_dimension_numbers<[1], [0], [0], [1], [0, 0, 1, 1], [], []>} : vector<8x32xf32>, vector<32x128xf32>, vector<8x128xf32> -> vector<8x128xf32>
    %c0_15 = arith.constant 0 : index
    %c0_16 = arith.constant 0 : index
    %31 = vector.load %arg3[%c0_15, %c0_16] : memref<1x128xf32, #tpu.memory_space<vmem>>, vector<1x128xf32>
    %32 = vector.broadcast %31 : vector<1x128xf32> to vector<8x128xf32>
    %33 = arith.addf %30, %32 : vector<8x128xf32>
    %34 = math.tanh %33 : vector<8x128xf32>
    %c0_17 = arith.constant 0 : index
    %c0_18 = arith.constant 0 : index
    %35 = vector.load %arg4[%c0_17, %c0_18] : memref<32x128xf32, #tpu.memory_space<vmem>>, vector<32x128xf32>
    %c0_19 = arith.constant 0 : index
    %c0_20 = arith.constant 0 : index
    %36 = vector.load %arg5[%c0_19, %c0_20] : memref<1x128xf32, #tpu.memory_space<vmem>>, vector<1x128xf32>
    %cst_21 = arith.constant 0.000000e+00 : f32
    %37 = vector.broadcast %cst_21 : f32 to vector<8x128xf32>
    %c0_22 = arith.constant 0 : index
    %c0_23 = arith.constant 0 : index
    %38 = vector.load %arg10[%c0_22, %c0_23] : memref<8x128xf32, #tpu.memory_space<vmem>>, vector<8x128xf32>
    tpu.vector_store %arg10[%c0_22, %c0_23], %37 {strides = array<i32>} : memref<8x128xf32, #tpu.memory_space<vmem>>, vector<8x128xf32>,
    %39 = vector.extract_strided_slice %34 {offsets = [0, 0], sizes = [8, 32], strides = [1, 1]} : vector<8x128xf32> to vector<8x32xf32>
    %cst_24 = arith.constant dense<0.000000e+00> : vector<8x128xf32>
    %40 = tpu.matmul %39, %35, %cst_24 {dimension_numbers = #tpu.dot_dimension_numbers<[1], [0], [0], [1], [0, 0, 1, 1], [], []>} : vector<8x32xf32>, vector<32x128xf32>, vector<8x128xf32> -> vector<8x128xf32>
    %41 = vector.broadcast %36 : vector<1x128xf32> to vector<8x128xf32>
    %42 = arith.addf %40, %41 : vector<8x128xf32>
    %cst_25 = arith.constant dense<0xFF800000> : vector<8xf32>
    %43 = vector.multi_reduction <maximumf>, %42, %cst_25 [1] : vector<8x128xf32> to vector<8xf32>
    %44 = vector.shape_cast %43 : vector<8xf32> to vector<8x1xf32>
    %45 = vector.broadcast %44 : vector<8x1xf32> to vector<8x128xf32>
    %46 = arith.subf %42, %45 : vector<8x128xf32>
    %47 = math.exp %46 : vector<8x128xf32>
    %cst_26 = arith.constant dense<0.000000e+00> : vector<8xf32>
    %48 = vector.multi_reduction <add>, %47, %cst_26 [1] : vector<8x128xf32> to vector<8xf32>
    %49 = vector.shape_cast %48 : vector<8xf32> to vector<8x1xf32>
    %50 = tpu.reciprocal %49 : vector<8x1xf32> -> vector<8x1xf32>
    %51 = arith.mulf %15, %50 : vector<8x1xf32>
    %c0_27 = arith.constant 0 : index
    %c0_28 = arith.constant 0 : index
    %52 = vector.load %arg10[%c0_27, %c0_28] : memref<8x128xf32, #tpu.memory_space<vmem>>, vector<8x128xf32>
    %53 = vector.broadcast %51 : vector<8x1xf32> to vector<8x128xf32>
    %54 = arith.mulf %47, %53 : vector<8x128xf32>
    %55 = arith.addf %52, %54 : vector<8x128xf32>
    %c0_29 = arith.constant 0 : index
    %c0_30 = arith.constant 0 : index
    %56 = vector.load %arg10[%c0_29, %c0_30] : memref<8x128xf32, #tpu.memory_space<vmem>>, vector<8x128xf32>
    tpu.vector_store %arg10[%c0_29, %c0_30], %55 {strides = array<i32>} : memref<8x128xf32, #tpu.memory_space<vmem>>, vector<8x128xf32>,
    %57 = vector.extract_strided_slice %34 {offsets = [0, 32], sizes = [8, 32], strides = [1, 1]} : vector<8x128xf32> to vector<8x32xf32>
    %cst_31 = arith.constant dense<0.000000e+00> : vector<8x128xf32>
    %58 = tpu.matmul %57, %35, %cst_31 {dimension_numbers = #tpu.dot_dimension_numbers<[1], [0], [0], [1], [0, 0, 1, 1], [], []>} : vector<8x32xf32>, vector<32x128xf32>, vector<8x128xf32> -> vector<8x128xf32>
    %59 = vector.broadcast %36 : vector<1x128xf32> to vector<8x128xf32>
    %60 = arith.addf %58, %59 : vector<8x128xf32>
    %cst_32 = arith.constant dense<0xFF800000> : vector<8xf32>
    %61 = vector.multi_reduction <maximumf>, %60, %cst_32 [1] : vector<8x128xf32> to vector<8xf32>
    %62 = vector.shape_cast %61 : vector<8xf32> to vector<8x1xf32>
    %63 = vector.broadcast %62 : vector<8x1xf32> to vector<8x128xf32>
    %64 = arith.subf %60, %63 : vector<8x128xf32>
    %65 = math.exp %64 : vector<8x128xf32>
    %cst_33 = arith.constant dense<0.000000e+00> : vector<8xf32>
    %66 = vector.multi_reduction <add>, %65, %cst_33 [1] : vector<8x128xf32> to vector<8xf32>
    %67 = vector.shape_cast %66 : vector<8xf32> to vector<8x1xf32>
    %68 = tpu.reciprocal %67 : vector<8x1xf32> -> vector<8x1xf32>
    %69 = arith.mulf %20, %68 : vector<8x1xf32>
    %c0_34 = arith.constant 0 : index
    %c0_35 = arith.constant 0 : index
    %70 = vector.load %arg10[%c0_34, %c0_35] : memref<8x128xf32, #tpu.memory_space<vmem>>, vector<8x128xf32>
    %71 = vector.broadcast %69 : vector<8x1xf32> to vector<8x128xf32>
    %72 = arith.mulf %65, %71 : vector<8x128xf32>
    %73 = arith.addf %70, %72 : vector<8x128xf32>
    %c0_36 = arith.constant 0 : index
    %c0_37 = arith.constant 0 : index
    %74 = vector.load %arg10[%c0_36, %c0_37] : memref<8x128xf32, #tpu.memory_space<vmem>>, vector<8x128xf32>
    tpu.vector_store %arg10[%c0_36, %c0_37], %73 {strides = array<i32>} : memref<8x128xf32, #tpu.memory_space<vmem>>, vector<8x128xf32>,
    %75 = vector.extract_strided_slice %34 {offsets = [0, 64], sizes = [8, 32], strides = [1, 1]} : vector<8x128xf32> to vector<8x32xf32>
    %cst_38 = arith.constant dense<0.000000e+00> : vector<8x128xf32>
    %76 = tpu.matmul %75, %35, %cst_38 {dimension_numbers = #tpu.dot_dimension_numbers<[1], [0], [0], [1], [0, 0, 1, 1], [], []>} : vector<8x32xf32>, vector<32x128xf32>, vector<8x128xf32> -> vector<8x128xf32>
    %77 = vector.broadcast %36 : vector<1x128xf32> to vector<8x128xf32>
    %78 = arith.addf %76, %77 : vector<8x128xf32>
    %cst_39 = arith.constant dense<0xFF800000> : vector<8xf32>
    %79 = vector.multi_reduction <maximumf>, %78, %cst_39 [1] : vector<8x128xf32> to vector<8xf32>
    %80 = vector.shape_cast %79 : vector<8xf32> to vector<8x1xf32>
    %81 = vector.broadcast %80 : vector<8x1xf32> to vector<8x128xf32>
    %82 = arith.subf %78, %81 : vector<8x128xf32>
    %83 = math.exp %82 : vector<8x128xf32>
    %cst_40 = arith.constant dense<0.000000e+00> : vector<8xf32>
    %84 = vector.multi_reduction <add>, %83, %cst_40 [1] : vector<8x128xf32> to vector<8xf32>
    %85 = vector.shape_cast %84 : vector<8xf32> to vector<8x1xf32>
    %86 = tpu.reciprocal %85 : vector<8x1xf32> -> vector<8x1xf32>
    %87 = arith.mulf %25, %86 : vector<8x1xf32>
    %c0_41 = arith.constant 0 : index
    %c0_42 = arith.constant 0 : index
    %88 = vector.load %arg10[%c0_41, %c0_42] : memref<8x128xf32, #tpu.memory_space<vmem>>, vector<8x128xf32>
    %89 = vector.broadcast %87 : vector<8x1xf32> to vector<8x128xf32>
    %90 = arith.mulf %83, %89 : vector<8x128xf32>
    %91 = arith.addf %88, %90 : vector<8x128xf32>
    %c0_43 = arith.constant 0 : index
    %c0_44 = arith.constant 0 : index
    %92 = vector.load %arg10[%c0_43, %c0_44] : memref<8x128xf32, #tpu.memory_space<vmem>>, vector<8x128xf32>
    tpu.vector_store %arg10[%c0_43, %c0_44], %91 {strides = array<i32>} : memref<8x128xf32, #tpu.memory_space<vmem>>, vector<8x128xf32>,
    %93 = vector.extract_strided_slice %34 {offsets = [0, 96], sizes = [8, 32], strides = [1, 1]} : vector<8x128xf32> to vector<8x32xf32>
    %cst_45 = arith.constant dense<0.000000e+00> : vector<8x128xf32>
    %94 = tpu.matmul %93, %35, %cst_45 {dimension_numbers = #tpu.dot_dimension_numbers<[1], [0], [0], [1], [0, 0, 1, 1], [], []>} : vector<8x32xf32>, vector<32x128xf32>, vector<8x128xf32> -> vector<8x128xf32>
    %95 = vector.broadcast %36 : vector<1x128xf32> to vector<8x128xf32>
    %96 = arith.addf %94, %95 : vector<8x128xf32>
    %cst_46 = arith.constant dense<0xFF800000> : vector<8xf32>
    %97 = vector.multi_reduction <maximumf>, %96, %cst_46 [1] : vector<8x128xf32> to vector<8xf32>
    %98 = vector.shape_cast %97 : vector<8xf32> to vector<8x1xf32>
    %99 = vector.broadcast %98 : vector<8x1xf32> to vector<8x128xf32>
    %100 = arith.subf %96, %99 : vector<8x128xf32>
    %101 = math.exp %100 : vector<8x128xf32>
    %cst_47 = arith.constant dense<0.000000e+00> : vector<8xf32>
    %102 = vector.multi_reduction <add>, %101, %cst_47 [1] : vector<8x128xf32> to vector<8xf32>
    %103 = vector.shape_cast %102 : vector<8xf32> to vector<8x1xf32>
    %104 = tpu.reciprocal %103 : vector<8x1xf32> -> vector<8x1xf32>
    %105 = arith.mulf %28, %104 : vector<8x1xf32>
    %c0_48 = arith.constant 0 : index
    %c0_49 = arith.constant 0 : index
    %106 = vector.load %arg10[%c0_48, %c0_49] : memref<8x128xf32, #tpu.memory_space<vmem>>, vector<8x128xf32>
    %107 = vector.broadcast %105 : vector<8x1xf32> to vector<8x128xf32>
    %108 = arith.mulf %101, %107 : vector<8x128xf32>
    %109 = arith.addf %106, %108 : vector<8x128xf32>
    %c0_50 = arith.constant 0 : index
    %c0_51 = arith.constant 0 : index
    %110 = vector.load %arg10[%c0_50, %c0_51] : memref<8x128xf32, #tpu.memory_space<vmem>>, vector<8x128xf32>
    tpu.vector_store %arg10[%c0_50, %c0_51], %109 {strides = array<i32>} : memref<8x128xf32, #tpu.memory_space<vmem>>, vector<8x128xf32>,
    %c0_52 = arith.constant 0 : index
    %c0_53 = arith.constant 0 : index
    %111 = vector.load %arg10[%c0_52, %c0_53] : memref<8x128xf32, #tpu.memory_space<vmem>>, vector<8x128xf32>
    %c0_54 = arith.constant 0 : index
    %c0_55 = arith.constant 0 : index
    %112 = vector.load %arg8[%c0_54, %c0_55] : memref<8x128xf32, #tpu.memory_space<vmem>>, vector<8x128xf32>
    tpu.vector_store %arg8[%c0_54, %c0_55], %111 {strides = array<i32>} : memref<8x128xf32, #tpu.memory_space<vmem>>, vector<8x128xf32>,
    return
  }
  func.func @transform_0(%arg0: i32) -> (i32, i32) {
    %c0_i32 = arith.constant 0 : i32
    %c0_i32_0 = arith.constant 0 : i32
    return %arg0, %c0_i32 : i32, i32
  }
  func.func @transform_1(%arg0: i32) -> (i32, i32) {
    %c0_i32 = arith.constant 0 : i32
    %c0_i32_0 = arith.constant 0 : i32
    %c0_i32_1 = arith.constant 0 : i32
    return %c0_i32, %c0_i32_0 : i32, i32
  }
  func.func @transform_2(%arg0: i32) -> (i32, i32) {
    %c0_i32 = arith.constant 0 : i32
    %c0_i32_0 = arith.constant 0 : i32
    %c0_i32_1 = arith.constant 0 : i32
    return %c0_i32, %c0_i32_0 : i32, i32
  }
  func.func @transform_3(%arg0: i32) -> (i32, i32) {
    %c0_i32 = arith.constant 0 : i32
    %c0_i32_0 = arith.constant 0 : i32
    %c0_i32_1 = arith.constant 0 : i32
    return %c0_i32, %c0_i32_0 : i32, i32
  }
  func.func @transform_4(%arg0: i32) -> (i32, i32) {
    %c0_i32 = arith.constant 0 : i32
    %c0_i32_0 = arith.constant 0 : i32
    %c0_i32_1 = arith.constant 0 : i32
    return %c0_i32, %c0_i32_0 : i32, i32
  }
  func.func @transform_5(%arg0: i32) -> (i32, i32) {
    %c0_i32 = arith.constant 0 : i32
    %c0_i32_0 = arith.constant 0 : i32
    %c0_i32_1 = arith.constant 0 : i32
    return %c0_i32, %c0_i32_0 : i32, i32
  }
  func.func @transform_6(%arg0: i32) -> (i32, i32) {
    %c0_i32 = arith.constant 0 : i32
    %c0_i32_0 = arith.constant 0 : i32
    %c0_i32_1 = arith.constant 0 : i32
    return %c0_i32, %c0_i32_0 : i32, i32
  }
  func.func @transform_7(%arg0: i32) -> (i32, i32) {
    %c0_i32 = arith.constant 0 : i32
    %c0_i32_0 = arith.constant 0 : i32
    return %arg0, %c0_i32 : i32, i32
  }
  func.func @transform_8(%arg0: i32) -> (i32, i32) {
    %c0_i32 = arith.constant 0 : i32
    %c0_i32_0 = arith.constant 0 : i32
    return %arg0, %c0_i32 : i32, i32
  }
}

</mosaic_0001>

<llo_original>
// kernel: tpu_custom_call.1
$region0: #{tpu_custom_call.1}
  #allocation0 [shape = 'u32[]', space=smem, size = 0x4, offset = 0x4, fixed_abs, tag = 'smem constant byte address 0x4 - core index']
  #allocation1 [shape = 'u32[144,128]{1,0:T(1,128)}', space=vmem, size = 0x12000, scoped, tag = 'internal scratch']
  #allocation2 [shape = 'f32[8,128]{1,0:T(8,128)}', space=vmem, size = 0x1000, scoped, tag = 'scratch operand']
  %s0 = inlined_call_operand.hbm [shape: f32[16,32], index: 0, kind: input, shape index: {}]
  %s1 = inlined_call_operand.vmem [shape: f32[32,128], index: 1, kind: input, shape index: {}]
  %s2 = inlined_call_operand.vmem [shape: f32[1,128], index: 2, kind: input, shape index: {}]
  %s3 = inlined_call_operand.hbm [shape: f32[32,128], index: 3, kind: input, shape index: {}]
  %s4 = inlined_call_operand.vmem [shape: f32[1,128], index: 4, kind: input, shape index: {}]
  %s5 = inlined_call_operand.vmem [shape: f32[32,6], index: 5, kind: input, shape index: {}]
  %s6 = inlined_call_operand.vmem [shape: f32[1,6], index: 6, kind: input, shape index: {}]
  %s7 = inlined_call_operand.hbm [shape: f32[16,128], index: 7, kind: output, shape index: {0}]
  %s8 = inlined_call_operand.vmem [shape: f32[16,6], index: 8, kind: output, shape index: {1}]
  %9 = xla_tuple %s7, %s8
  %s10 = sld [smem:[#allocation0]]
  $region77: #{tpu_custom_call.1} parent=0
    _
  %s12 = ssub.s32 1, %s10
  %s13 = scalar_select 0, %s12, %s10
  $region1: #{tpu_custom_call.1} parent=0
    #allocation3 [shape = 'u8[8192]{0}', space=vmem, size = 0x2000, scoped, tag = 'input window, operand 0']
    #allocation4 [shape = 's32[2]{0}', space=sflag, size = 0x8, scoped, tag = 'scoped memory for tpu_custom_call.1']
    #allocation5 [shape = 's32[2]{0}', space=sflag, size = 0x8, scoped, tag = 'scoped memory for tpu_custom_call.1']
    #allocation6 [shape = 'u8[16384]{0}', space=vmem, size = 0x4000, scoped, tag = 'input window, operand 3, single buffered']
    #allocation7 [shape = 's32[1]{0}', space=sflag, size = 0x4, scoped, tag = 'scoped memory for tpu_custom_call.1']
    #allocation8 [shape = 'u8[8192]{0}', space=vmem, size = 0x2000, scoped, tag = 'output window, operand 0']
    %14 = vsyncpa [#allocation4], 0
    %s15 = scalar_lea.sflag [#allocation4], 1
    %16 = vsyncpa %s15, 0
    %17 = vsyncpa [#allocation7], 0
    %18 = vsyncpa [#allocation5], 0
    %s19 = scalar_lea.sflag [#allocation5], 1
    %20 = vsyncpa %s19, 0
    loop: start=0, step=1, limit=4
    $region2: #{tpu_custom_call.1} parent=1 // loop_pre_header
      _
    $region3: #{tpu_custom_call.1} parent=1 // loop_header
      %s22 = sphi 0, %s26
      %p23 = scmp.ge.s32.totalorder %s22, 4
      %s32 = sphi 0, %s34
      %s35 = sphi 0, %s32
      %s36 = sphi 0, %s35
      %s52 = sphi 0, %s36
      %s56 = sphi 0, %s56
      %s58 = sphi 0, %s56
      %s59 = sphi 0, %s58
      %s73 = sphi 0, %s59
      %s77 = sphi 0, %s77
      %s79 = sphi 0, %s77
      %s80 = sphi 0, %s79
      %s94 = sphi 0, %s80
      %s98 = sphi 0, %s98
      %s100 = sphi 0, %s98
      %s101 = sphi 0, %s100
      %s115 = sphi 0, %s101
      %s119 = sphi 0, %s119
      %s121 = sphi 0, %s119
      %s122 = sphi 0, %s121
      %s136 = sphi 0, %s122
      %s140 = sphi 0, %s140
      %s142 = sphi 0, %s140
      %s143 = sphi 0, %s142
      %s157 = sphi 0, %s143
      %s161 = sphi 0, %s161
      %s163 = sphi 0, %s161
      %s164 = sphi 0, %s163
      %s178 = sphi 0, %s164
      %s184 = sphi 0, %s186
      %s187 = sphi 0, %s184
      %s188 = sphi 0, %s187
      %s204 = sphi 0, %s188
      %s210 = sphi 0, %s212
      %s213 = sphi 0, %s210
      %s214 = sphi 0, %s213
      %s230 = sphi 0, %s214
    $region4: #{tpu_custom_call.1} parent=1 // loop_header_branch
      %25 = sbr.rel (%p23) target = $region8
    $region5: #{tpu_custom_call.1} parent=1 // loop_body
      %s27 = ssub.s32 %s22, 1
      %s28 = ssub.s32 %s22, 2
      %s29 = sadd.s32 %s22, 1
      %s30 = ssub.s32 %s22, %s29
      %p31 = scmp.eq.s32.totalorder %s30, 0
      %s33 = sadd.s32 %s32, 1
      %s34 = scalar_select %p31, %s32, %s33
      %p37 = pneg %p31
      %p38 = scmp.eq.s32.totalorder %s22, 1
      %p39 = por %p37, %p38
      %p40 = scmp.ne.s32.totalorder %s32, %s35
      %p41 = scmp.eq.s32.totalorder %s22, 0
      %p42 = por %p40, %p41
      %p43 = scmp.ne.s32.totalorder %s32, %s35
      %p44 = scmp.eq.s32.totalorder %s27, 1
      %p45 = por %p43, %p44
      %p46 = scmp.ne.s32.totalorder %s35, %s36
      %p47 = scmp.eq.s32.totalorder %s27, 0
      %p48 = por %p46, %p47
      %p49 = scmp.ne.s32.totalorder %s35, %s36
      %p50 = scmp.eq.s32.totalorder %s28, 1
      %p51 = por %p49, %p50
      %p53 = scmp.ne.s32.totalorder %s36, %s52
      %p54 = scmp.eq.s32.totalorder %s28, 0
      %p55 = por %p53, %p54
      %s57 = sadd.s32 %s56, 1
      %p60 = scmp.eq.s32.totalorder %s22, 1
      %p61 = scmp.ne.s32.totalorder %s56, %s58
      %p62 = scmp.eq.s32.totalorder %s22, 0
      %p63 = por %p61, %p62
      %p64 = scmp.ne.s32.totalorder %s56, %s58
      %p65 = scmp.eq.s32.totalorder %s27, 1
      %p66 = por %p64, %p65
      %p67 = scmp.ne.s32.totalorder %s58, %s59
      %p68 = scmp.eq.s32.totalorder %s27, 0
      %p69 = por %p67, %p68
      %p70 = scmp.ne.s32.totalorder %s58, %s59
      %p71 = scmp.eq.s32.totalorder %s28, 1
      %p72 = por %p70, %p71
      %p74 = scmp.ne.s32.totalorder %s59, %s73
      %p75 = scmp.eq.s32.totalorder %s28, 0
      %p76 = por %p74, %p75
      %s78 = sadd.s32 %s77, 1
      %p81 = scmp.eq.s32.totalorder %s22, 1
      %p82 = scmp.ne.s32.totalorder %s77, %s79
      %p83 = scmp.eq.s32.totalorder %s22, 0
      %p84 = por %p82, %p83
      %p85 = scmp.ne.s32.totalorder %s77, %s79
      %p86 = scmp.eq.s32.totalorder %s27, 1
      %p87 = por %p85, %p86
      %p88 = scmp.ne.s32.totalorder %s79, %s80
      %p89 = scmp.eq.s32.totalorder %s27, 0
      %p90 = por %p88, %p89
      %p91 = scmp.ne.s32.totalorder %s79, %s80
      %p92 = scmp.eq.s32.totalorder %s28, 1
      %p93 = por %p91, %p92
      %p95 = scmp.ne.s32.totalorder %s80, %s94
      %p96 = scmp.eq.s32.totalorder %s28, 0
      %p97 = por %p95, %p96
      %s99 = sadd.s32 %s98, 1
      %p102 = scmp.eq.s32.totalorder %s22, 1
      %p103 = scmp.ne.s32.totalorder %s98, %s100
      %p104 = scmp.eq.s32.totalorder %s22, 0
      %p105 = por %p103, %p104
      %p106 = scmp.ne.s32.totalorder %s98, %s100
      %p107 = scmp.eq.s32.totalorder %s27, 1
      %p108 = por %p106, %p107
      %p109 = scmp.ne.s32.totalorder %s100, %s101
      %p110 = scmp.eq.s32.totalorder %s27, 0
      %p111 = por %p109, %p110
      %p112 = scmp.ne.s32.totalorder %s100, %s101
      %p113 = scmp.eq.s32.totalorder %s28, 1
      %p114 = por %p112, %p113
      %p116 = scmp.ne.s32.totalorder %s101, %s115
      %p117 = scmp.eq.s32.totalorder %s28, 0
      %p118 = por %p116, %p117
      %s120 = sadd.s32 %s119, 1
      %p123 = scmp.eq.s32.totalorder %s22, 1
      %p124 = scmp.ne.s32.totalorder %s119, %s121
      %p125 = scmp.eq.s32.totalorder %s22, 0
      %p126 = por %p124, %p125
      %p127 = scmp.ne.s32.totalorder %s119, %s121
      %p128 = scmp.eq.s32.totalorder %s27, 1
      %p129 = por %p127, %p128
      %p130 = scmp.ne.s32.totalorder %s121, %s122
      %p131 = scmp.eq.s32.totalorder %s27, 0
      %p132 = por %p130, %p131
      %p133 = scmp.ne.s32.totalorder %s121, %s122
      %p134 = scmp.eq.s32.totalorder %s28, 1
      %p135 = por %p133, %p134
      %p137 = scmp.ne.s32.totalorder %s122, %s136
      %p138 = scmp.eq.s32.totalorder %s28, 0
      %p139 = por %p137, %p138
      %s141 = sadd.s32 %s140, 1
      %p144 = scmp.eq.s32.totalorder %s22, 1
      %p145 = scmp.ne.s32.totalorder %s140, %s142
      %p146 = scmp.eq.s32.totalorder %s22, 0
      %p147 = por %p145, %p146
      %p148 = scmp.ne.s32.totalorder %s140, %s142
      %p149 = scmp.eq.s32.totalorder %s27, 1
      %p150 = por %p148, %p149
      %p151 = scmp.ne.s32.totalorder %s142, %s143
      %p152 = scmp.eq.s32.totalorder %s27, 0
      %p153 = por %p151, %p152
      %p154 = scmp.ne.s32.totalorder %s142, %s143
      %p155 = scmp.eq.s32.totalorder %s28, 1
      %p156 = por %p154, %p155
      %p158 = scmp.ne.s32.totalorder %s143, %s157
      %p159 = scmp.eq.s32.totalorder %s28, 0
      %p160 = por %p158, %p159
      %s162 = sadd.s32 %s161, 1
      %p165 = scmp.eq.s32.totalorder %s22, 1
      %p166 = scmp.ne.s32.totalorder %s161, %s163
      %p167 = scmp.eq.s32.totalorder %s22, 0
      %p168 = por %p166, %p167
      %p169 = scmp.ne.s32.totalorder %s161, %s163
      %p170 = scmp.eq.s32.totalorder %s27, 1
      %p171 = por %p169, %p170
      %p172 = scmp.ne.s32.totalorder %s163, %s164
      %p173 = scmp.eq.s32.totalorder %s27, 0
      %p174 = por %p172, %p173
      %p175 = scmp.ne.s32.totalorder %s163, %s164
      %p176 = scmp.eq.s32.totalorder %s28, 1
      %p177 = por %p175, %p176
      %p179 = scmp.ne.s32.totalorder %s164, %s178
      %p180 = scmp.eq.s32.totalorder %s28, 0
      %p181 = por %p179, %p180
      %s182 = ssub.s32 %s22, %s29
      %p183 = scmp.eq.s32.totalorder %s182, 0
      %s185 = sadd.s32 %s184, 1
      %s186 = scalar_select %p183, %s184, %s185
      %p189 = pneg %p183
      %p190 = scmp.eq.s32.totalorder %s22, 1
      %p191 = por %p189, %p190
      %p192 = scmp.ne.s32.totalorder %s184, %s187
      %p193 = scmp.eq.s32.totalorder %s22, 0
      %p194 = por %p192, %p193
      %p195 = scmp.ne.s32.totalorder %s184, %s187
      %p196 = scmp.eq.s32.totalorder %s27, 1
      %p197 = por %p195, %p196
      %p198 = scmp.ne.s32.totalorder %s187, %s188
      %p199 = scmp.eq.s32.totalorder %s27, 0
      %p200 = por %p198, %p199
      %p201 = scmp.ne.s32.totalorder %s187, %s188
      %p202 = scmp.eq.s32.totalorder %s28, 1
      %p203 = por %p201, %p202
      %p205 = scmp.ne.s32.totalorder %s188, %s204
      %p206 = scmp.eq.s32.totalorder %s28, 0
      %p207 = por %p205, %p206
      %s208 = ssub.s32 %s22, %s29
      %p209 = scmp.eq.s32.totalorder %s208, 0
      %s211 = sadd.s32 %s210, 1
      %s212 = scalar_select %p209, %s210, %s211
      %p215 = pneg %p209
      %p216 = scmp.eq.s32.totalorder %s22, 1
      %p217 = por %p215, %p216
      %p218 = scmp.ne.s32.totalorder %s210, %s213
      %p219 = scmp.eq.s32.totalorder %s22, 0
      %p220 = por %p218, %p219
      %p221 = scmp.ne.s32.totalorder %s210, %s213
      %p222 = scmp.eq.s32.totalorder %s27, 1
      %p223 = por %p221, %p222
      %p224 = scmp.ne.s32.totalorder %s213, %s214
      %p225 = scmp.eq.s32.totalorder %s27, 0
      %p226 = por %p224, %p225
      %p227 = scmp.ne.s32.totalorder %s213, %s214
      %p228 = scmp.eq.s32.totalorder %s28, 1
      %p229 = por %p227, %p228
      %p231 = scmp.ne.s32.totalorder %s214, %s230
      %p232 = scmp.eq.s32.totalorder %s28, 0
      %p233 = por %p231, %p232
      %p234 = scmp.le.s32.totalorder 1, %s22
      %p235 = scmp.lt.s32.totalorder %s22, 3
      %p236 = pnand %p234, %p235
      %p237 = pneg %p236
      // Predicated region
      $region9: #{tpu_custom_call.1} parent=5 // pred_check
        _
      $region10: #{tpu_custom_call.1} parent=5 // pred_check_branch
        %239 = sbr.rel (%p236) target = $region12
      $region11: #{tpu_custom_call.1} parent=5 // pred_region
        %s240 = ssub.s32 %s22, 1
        // Predicated region
        $region13: #{tpu_custom_call.1} parent=11 // pred_check
          %p241 = pneg %p69
        $region14: #{tpu_custom_call.1} parent=11 // pred_check_branch
          %243 = sbr.rel (%p241) target = $region16
        $region15: #{tpu_custom_call.1} parent=11 // pred_region
          _
        $region16: #{tpu_custom_call.1} parent=11 // pred_fallthru
          _
        // Predicated region
        $region17: #{tpu_custom_call.1} parent=11 // pred_check
          %p244 = pneg %p90
        $region18: #{tpu_custom_call.1} parent=11 // pred_check_branch
          %246 = sbr.rel (%p244) target = $region20
        $region19: #{tpu_custom_call.1} parent=11 // pred_region
          _
        $region20: #{tpu_custom_call.1} parent=11 // pred_fallthru
          _
        // Predicated region
        $region21: #{tpu_custom_call.1} parent=11 // pred_check
          %p247 = pneg %p111
        $region22: #{tpu_custom_call.1} parent=11 // pred_check_branch
          %249 = sbr.rel (%p247) target = $region24
        $region23: #{tpu_custom_call.1} parent=11 // pred_region
          %s251 = ssub.s32 512, 512
          %252 = vsyncadd [#allocation7], %s251
          %s253 = sshll.u32 [#allocation6], 4
          %s254 = int_to_ptr.vmem [resolvable:$true] %s253
          %259 = dma.hbm_to_vmem [thread:$0]  %s3, 512, %s254, [#allocation7], 128, 128, 8
        $region24: #{tpu_custom_call.1} parent=11 // pred_fallthru
          _
        // Predicated region
        $region25: #{tpu_custom_call.1} parent=11 // pred_check
          %p260 = pneg %p132
        $region26: #{tpu_custom_call.1} parent=11 // pred_check_branch
          %262 = sbr.rel (%p260) target = $region28
        $region27: #{tpu_custom_call.1} parent=11 // pred_region
          _
        $region28: #{tpu_custom_call.1} parent=11 // pred_fallthru
          _
        // Predicated region
        $region29: #{tpu_custom_call.1} parent=11 // pred_check
          %p263 = pneg %p153
        $region30: #{tpu_custom_call.1} parent=11 // pred_check_branch
          %265 = sbr.rel (%p263) target = $region32
        $region31: #{tpu_custom_call.1} parent=11 // pred_region
          _
        $region32: #{tpu_custom_call.1} parent=11 // pred_fallthru
          _
        // Predicated region
        $region33: #{tpu_custom_call.1} parent=11 // pred_check
          %p266 = pneg %p174
        $region34: #{tpu_custom_call.1} parent=11 // pred_check_branch
          %268 = sbr.rel (%p266) target = $region36
        $region35: #{tpu_custom_call.1} parent=11 // pred_region
          _
        $region36: #{tpu_custom_call.1} parent=11 // pred_fallthru
          _
      $region12: #{tpu_custom_call.1} parent=5 // pred_fallthru
        _
      %p269 = scmp.lt.s32.totalorder %s22, 2
      // Predicated region
      $region37: #{tpu_custom_call.1} parent=5 // pred_check
        %p270 = pneg %p269
      $region38: #{tpu_custom_call.1} parent=5 // pred_check_branch
        %272 = sbr.rel (%p270) target = $region40
      $region39: #{tpu_custom_call.1} parent=5 // pred_region
        // Predicated region
        $region41: #{tpu_custom_call.1} parent=39 // pred_check
          %p273 = pneg %p42
        $region42: #{tpu_custom_call.1} parent=39 // pred_check_branch
          %275 = sbr.rel (%p273) target = $region44
        $region43: #{tpu_custom_call.1} parent=39 // pred_region
          %s276 = sand.u32 %s32, 1
          %s277 = scalar_lea.sflag [#allocation4], %s276
          %s278 = sand.u32 %s32, 1
          %s279 = smul.addr %s278, 8
          %s280 = scalar_lea.vmem [#allocation3], %s279
          %s282 = ssub.s32 128, 128
          %283 = vsyncadd %s277, %s282
          %s284 = smul.addr %s22, 128
          %s285 = scalar_lea.hbm %s0, %s284
          %s287 = sshll.u32 %s280, 4
          %s288 = int_to_ptr.vmem [resolvable:$true] %s287
          %290 = dma.hbm_to_vmem [thread:$0]  %s285, 128, %s288, %s277
        $region44: #{tpu_custom_call.1} parent=39 // pred_fallthru
          _
      $region40: #{tpu_custom_call.1} parent=5 // pred_fallthru
        _
      %p291 = scmp.le.s32.totalorder 1, %s22
      %p292 = scmp.lt.s32.totalorder %s22, 3
      %p293 = pnand %p291, %p292
      %p294 = pneg %p293
      // Predicated region
      $region45: #{tpu_custom_call.1} parent=5 // pred_check
        _
      $region46: #{tpu_custom_call.1} parent=5 // pred_check_branch
        %296 = sbr.rel (%p293) target = $region48
      $region47: #{tpu_custom_call.1} parent=5 // pred_region
        %s297 = ssub.s32 %s22, 1
        %s298 = sand.u32 %s35, 1
        %s299 = scalar_lea.sflag [#allocation4], %s298
        %s300 = sand.u32 %s35, 1
        %s301 = smul.addr %s300, 8
        %s302 = scalar_lea.vmem [#allocation3], %s301
        // Predicated region
        $region49: #{tpu_custom_call.1} parent=47 // pred_check
          %p303 = pneg %p48
        $region50: #{tpu_custom_call.1} parent=47 // pred_check_branch
          %305 = sbr.rel (%p303) target = $region52
        $region51: #{tpu_custom_call.1} parent=47 // pred_region
          %306 = dma.done %s299, 128
        $region52: #{tpu_custom_call.1} parent=47 // pred_fallthru
          _
        // Predicated region
        $region53: #{tpu_custom_call.1} parent=47 // pred_check
          %p307 = pneg %p111
        $region54: #{tpu_custom_call.1} parent=47 // pred_check_branch
          %309 = sbr.rel (%p307) target = $region56
        $region55: #{tpu_custom_call.1} parent=47 // pred_region
          %310 = dma.done [#allocation7], 512
        $region56: #{tpu_custom_call.1} parent=47 // pred_fallthru
          _
        %s311 = sand.u32 %s35, 1
        %s312 = scalar_lea.sflag [#allocation4], %s311
        %s313 = sand.u32 %s35, 1
        %s314 = smul.addr %s313, 8
        %s315 = scalar_lea.vmem [#allocation3], %s314
        %p316 = pneg %p48
        %p317 = pneg %p45
        %p318 = pneg %p69
        %p319 = pneg %p66
        %p320 = pneg %p90
        %p321 = pneg %p87
        %p322 = pneg %p111
        %p323 = pneg %p108
        %p324 = pneg %p132
        %p325 = pneg %p129
        %p326 = pneg %p153
        %p327 = pneg %p150
        %p328 = pneg %p174
        %p329 = pneg %p171
        %p330 = pneg %p200
        %p331 = pneg %p197
        %s332 = sand.u32 %s187, 1
        %s333 = scalar_lea.sflag [#allocation5], %s332
        %s334 = sand.u32 %s187, 1
        %s335 = smul.addr %s334, 8
        %s336 = scalar_lea.vmem [#allocation8], %s335
        %p337 = pneg %p226
        %p338 = pneg %p223
        %p339 = scmp.lt.s32.totalorder %s27, 1
        %s340 = scalar_select %p339, %s27, 1
        %s341 = smul.addr %s340, 8
        %s342 = scalar_lea.vmem %s8, %s341
        %p343 = scmp.lt.s32.totalorder %s27, 1
        %s344 = scalar_select %p343, %s27, 1
        %s345 = smul.addr %s344, 8
        %s346 = scalar_lea.vmem %s8, %s345
        %v347 = vld [vmem:[%s302] sm:$0xff]
        %v348 = vld [vmem:[%s5] sm:$0xff]
        %v349 = vld [vmem:[%s5 + $0x8] sm:$0xff]
        %v350 = vld [vmem:[%s5 + $0x10] sm:$0xff]
        %v351 = vld [vmem:[%s5 + $0x18] sm:$0xff]
        %v352 = vld [vmem:[%s6] sm:$0x1]
        %v354 = vlaneseq
        %v355 = vshrl.u32 %v354, 7
        %v356 = vsub.s32 0, %v355
        %v357 = vrot.slane %v352, %v356
        %vm359 = vcmask 261120
        %v361 = vsel %vm359, %v347, 0
        %363 = vmatprep.subr.mxu0 0.0
        %364 = vmatpush1.msra.mxu0 %v348
        %365 = vmatprep.subr.mxu0 0.0
        %366 = vmatpush1.msra.mxu0 %v349
        %367 = vmatprep.subr.mxu0 0.0
        %368 = vmatpush1.msra.mxu0 %v350
        %369 = vmatprep.subr.mxu0 0.0
        %370 = vmatpush1.msra.mxu0 %v351
        %371 = vmatprep.subr.mxu0 0.0
        %372 = vmatpush1.msra.mxu0 0.0
        %373 = vmatprep.subr.mxu0 0.0
        %374 = vmatpush1.msra.mxu0 0.0
        %375 = vmatprep.subr.mxu0 0.0
        %376 = vmatpush1.msra.mxu0 0.0
        %377 = vmatprep.subr.mxu0 0.0
        %378 = vmatpush1.msra.mxu0 0.0
        %379 = vmatprep.subr.mxu0 0.0
        %380 = vmatpush1.msra.mxu0 0.0
        %381 = vmatprep.subr.mxu0 0.0
        %382 = vmatpush1.msra.mxu0 0.0
        %383 = vmatprep.subr.mxu0 0.0
        %384 = vmatpush1.msra.mxu0 0.0
        %385 = vmatprep.subr.mxu0 0.0
        %386 = vmatpush1.msra.mxu0 0.0
        %387 = vmatprep.subr.mxu0 0.0
        %388 = vmatpush1.msra.mxu0 0.0
        %389 = vmatprep.subr.mxu0 0.0
        %390 = vmatpush1.msra.mxu0 0.0
        %391 = vmatprep.subr.mxu0 0.0
        %392 = vmatpush1.msra.mxu0 0.0
        %393 = vmatprep.subr.mxu0 0.0
        %394 = vmatpush1.msra.mxu0 0.0
        %395 = vmatprep.subr.mxu0 0.0
        %396 = vmatpush1.msra.mxu0 0.0
        %397 = vmatprep.subr.mxu0 0.0
        %398 = vmatpush1.msra.mxu0 0.0
        %399 = vmatprep.subr.mxu0 0.0
        %400 = vmatpush1.msra.mxu0 0.0
        %401 = vmatprep.subr.mxu0 0.0
        %402 = vmatpush1.msra.mxu0 0.0
        %403 = vmatprep.subr.mxu0 0.0
        %404 = vmatpush1.msra.mxu0 0.0
        %405 = vmatprep.subr.mxu0 0.0
        %406 = vmatpush1.msra.mxu0 0.0
        %407 = vmatprep.subr.mxu0 0.0
        %408 = vmatpush1.msra.mxu0 0.0
        %409 = vmatprep.subr.mxu0 0.0
        %410 = vmatpush1.msra.mxu0 0.0
        %411 = vmatprep.subr.mxu0 0.0
        %412 = vmatpush1.msra.mxu0 0.0
        %413 = vmatprep.subr.mxu0 0.0
        %414 = vmatpush1.msra.mxu0 0.0
        %415 = vmatprep.subr.mxu0 0.0
        %416 = vmatpush1.msra.mxu0 0.0
        %417 = vmatprep.subr.mxu0 0.0
        %418 = vmatpush1.msra.mxu0 0.0
        %419 = vmatprep.subr.mxu0 0.0
        %420 = vmatpush1.msra.mxu0 0.0
        %421 = vmatprep.subr.mxu0 0.0
        %422 = vmatpush1.msra.mxu0 0.0
        %423 = vmatprep.subr.mxu0 0.0
        %424 = vmatpush1.msra.mxu0 0.0
        %425 = vmatprep.subr.mxu0 0.0
        %426 = vmatpush1.msra.mxu0 0.0
        %427 = vmatprep.mubr.f32.mxu0 0.0
        %428 = vmatmul.mubr.f32.gmra.mrb[0].mxu0 %v361
        %v429 = vpop.f32.mrb[0].mxu0
        %v430 = vadd.f32 %v357, %v429
        %v431 = vpop.f32.mrb[0].mxu0
        %432 = vdwg.mxu0
        %vm433 = vcmask 48128
        %434 = vst.msk [vmem:[%s346] sm:$0xff] %vm433, %v430
        %v435 = vxor.u32 %v430, 2147483648
        %v436 = vmul.f32 %v435, 1.442695
        %v437 = vpow.pop %v436
        %v438 = vadd.f32 %v437, 1.0
        %v439 = vrcp.pop %v438
        %v440 = vmul.f32 1.0, %v439
        %v441 = vsub.f32 1.0, %v440
        %443 = vrot.lane.b32.xlu0 %v440, 127
        %v444 = vpop.permute.xlu0 %443
        %v446 = vmul.f32 %v441, %v444
        %448 = vrot.lane.b32.xlu0 %v441, 127
        %v449 = vpop.permute.xlu0 %448
        %v451 = vmul.f32 %v441, %v449
        %452 = vrot.lane.b32.xlu0 %v440, 126
        %v453 = vpop.permute.xlu0 %452
        %v455 = vmul.f32 %v451, %v453
        %456 = vrot.lane.b32.xlu0 %v441, 126
        %v457 = vpop.permute.xlu0 %456
        %v459 = vmul.f32 %v451, %v457
        %v460 = vld [vmem:[%s1] sm:$0xff]
        %v461 = vld [vmem:[%s1 + $0x8] sm:$0xff]
        %v462 = vld [vmem:[%s1 + $0x10] sm:$0xff]
        %v463 = vld [vmem:[%s1 + $0x18] sm:$0xff]
        %v464 = vld [vmem:[%s2] sm:$0x1]
        %v466 = vlaneseq
        %v467 = vshrl.u32 %v466, 7
        %v468 = vsub.s32 0, %v467
        %v469 = vrot.slane %v464, %v468
        %471 = vmatprep.subr.mxu0 0.0
        %472 = vmatpush1.msra.mxu0 %v460
        %473 = vmatprep.subr.mxu0 0.0
        %474 = vmatpush1.msra.mxu0 %v461
        %475 = vmatprep.subr.mxu0 0.0
        %476 = vmatpush1.msra.mxu0 %v462
        %477 = vmatprep.subr.mxu0 0.0
        %478 = vmatpush1.msra.mxu0 %v463
        %479 = vmatprep.subr.mxu0 0.0
        %480 = vmatpush1.msra.mxu0 0.0
        %481 = vmatprep.subr.mxu0 0.0
        %482 = vmatpush1.msra.mxu0 0.0
        %483 = vmatprep.subr.mxu0 0.0
        %484 = vmatpush1.msra.mxu0 0.0
        %485 = vmatprep.subr.mxu0 0.0
        %486 = vmatpush1.msra.mxu0 0.0
        %487 = vmatprep.subr.mxu0 0.0
        %488 = vmatpush1.msra.mxu0 0.0
        %489 = vmatprep.subr.mxu0 0.0
        %490 = vmatpush1.msra.mxu0 0.0
        %491 = vmatprep.subr.mxu0 0.0
        %492 = vmatpush1.msra.mxu0 0.0
        %493 = vmatprep.subr.mxu0 0.0
        %494 = vmatpush1.msra.mxu0 0.0
        %495 = vmatprep.subr.mxu0 0.0
        %496 = vmatpush1.msra.mxu0 0.0
        %497 = vmatprep.subr.mxu0 0.0
        %498 = vmatpush1.msra.mxu0 0.0
        %499 = vmatprep.subr.mxu0 0.0
        %500 = vmatpush1.msra.mxu0 0.0
        %501 = vmatprep.subr.mxu0 0.0
        %502 = vmatpush1.msra.mxu0 0.0
        %503 = vmatprep.subr.mxu0 0.0
        %504 = vmatpush1.msra.mxu0 0.0
        %505 = vmatprep.subr.mxu0 0.0
        %506 = vmatpush1.msra.mxu0 0.0
        %507 = vmatprep.subr.mxu0 0.0
        %508 = vmatpush1.msra.mxu0 0.0
        %509 = vmatprep.subr.mxu0 0.0
        %510 = vmatpush1.msra.mxu0 0.0
        %511 = vmatprep.subr.mxu0 0.0
        %512 = vmatpush1.msra.mxu0 0.0
        %513 = vmatprep.subr.mxu0 0.0
        %514 = vmatpush1.msra.mxu0 0.0
        %515 = vmatprep.subr.mxu0 0.0
        %516 = vmatpush1.msra.mxu0 0.0
        %517 = vmatprep.subr.mxu0 0.0
        %518 = vmatpush1.msra.mxu0 0.0
        %519 = vmatprep.subr.mxu0 0.0
        %520 = vmatpush1.msra.mxu0 0.0
        %521 = vmatprep.subr.mxu0 0.0
        %522 = vmatpush1.msra.mxu0 0.0
        %523 = vmatprep.subr.mxu0 0.0
        %524 = vmatpush1.msra.mxu0 0.0
        %525 = vmatprep.subr.mxu0 0.0
        %526 = vmatpush1.msra.mxu0 0.0
        %527 = vmatprep.subr.mxu0 0.0
        %528 = vmatpush1.msra.mxu0 0.0
        %529 = vmatprep.subr.mxu0 0.0
        %530 = vmatpush1.msra.mxu0 0.0
        %531 = vmatprep.subr.mxu0 0.0
        %532 = vmatpush1.msra.mxu0 0.0
        %533 = vmatprep.subr.mxu0 0.0
        %534 = vmatpush1.msra.mxu0 0.0
        %535 = vmatprep.mubr.f32.mxu0 0.0
        %536 = vmatmul.mubr.f32.gmra.mrb[0].mxu0 %v361
        %v537 = vpop.f32.mrb[0].mxu0
        %v538 = vadd.f32 %v469, %v537
        %v539 = vpop.f32.mrb[0].mxu0
        %540 = vdwg.mxu0
        %v541 = vtanh.pop %v538
        %v542 = vld [vmem:[#allocation6] sm:$0xff]
        %v543 = vld [vmem:[#allocation6 + $0x8] sm:$0xff]
        %v544 = vld [vmem:[#allocation6 + $0x10] sm:$0xff]
        %v545 = vld [vmem:[#allocation6 + $0x18] sm:$0xff]
        %v546 = vld [vmem:[%s4] sm:$0x1]
        %547 = vst [vmem:[#allocation2] sm:$0xff] 0.0
        %v549 = vlaneseq
        %v550 = vshrl.u32 %v549, 7
        %v551 = vsub.s32 0, %v550
        %v552 = vrot.slane %v546, %v551
        %v555 = vsel %vm359, %v541, 0
        %557 = vmatprep.subr.mxu0 0.0
        %558 = vmatpush1.msra.mxu0 %v542
        %559 = vmatprep.subr.mxu0 0.0
        %560 = vmatpush1.msra.mxu0 %v543
        %561 = vmatprep.subr.mxu0 0.0
        %562 = vmatpush1.msra.mxu0 %v544
        %563 = vmatprep.subr.mxu0 0.0
        %564 = vmatpush1.msra.mxu0 %v545
        %565 = vmatprep.subr.mxu0 0.0
        %566 = vmatpush1.msra.mxu0 0.0
        %567 = vmatprep.subr.mxu0 0.0
        %568 = vmatpush1.msra.mxu0 0.0
        %569 = vmatprep.subr.mxu0 0.0
        %570 = vmatpush1.msra.mxu0 0.0
        %571 = vmatprep.subr.mxu0 0.0
        %572 = vmatpush1.msra.mxu0 0.0
        %573 = vmatprep.subr.mxu0 0.0
        %574 = vmatpush1.msra.mxu0 0.0
        %575 = vmatprep.subr.mxu0 0.0
        %576 = vmatpush1.msra.mxu0 0.0
        %577 = vmatprep.subr.mxu0 0.0
        %578 = vmatpush1.msra.mxu0 0.0
        %579 = vmatprep.subr.mxu0 0.0
        %580 = vmatpush1.msra.mxu0 0.0
        %581 = vmatprep.subr.mxu0 0.0
        %582 = vmatpush1.msra.mxu0 0.0
        %583 = vmatprep.subr.mxu0 0.0
        %584 = vmatpush1.msra.mxu0 0.0
        %585 = vmatprep.subr.mxu0 0.0
        %586 = vmatpush1.msra.mxu0 0.0
        %587 = vmatprep.subr.mxu0 0.0
        %588 = vmatpush1.msra.mxu0 0.0
        %589 = vmatprep.subr.mxu0 0.0
        %590 = vmatpush1.msra.mxu0 0.0
        %591 = vmatprep.subr.mxu0 0.0
        %592 = vmatpush1.msra.mxu0 0.0
        %593 = vmatprep.subr.mxu0 0.0
        %594 = vmatpush1.msra.mxu0 0.0
        %595 = vmatprep.subr.mxu0 0.0
        %596 = vmatpush1.msra.mxu0 0.0
        %597 = vmatprep.subr.mxu0 0.0
        %598 = vmatpush1.msra.mxu0 0.0
        %599 = vmatprep.subr.mxu0 0.0
        %600 = vmatpush1.msra.mxu0 0.0
        %601 = vmatprep.subr.mxu0 0.0
        %602 = vmatpush1.msra.mxu0 0.0
        %603 = vmatprep.subr.mxu0 0.0
        %604 = vmatpush1.msra.mxu0 0.0
        %605 = vmatprep.subr.mxu0 0.0
        %606 = vmatpush1.msra.mxu0 0.0
        %607 = vmatprep.subr.mxu0 0.0
        %608 = vmatpush1.msra.mxu0 0.0
        %609 = vmatprep.subr.mxu0 0.0
        %610 = vmatpush1.msra.mxu0 0.0
        %611 = vmatprep.subr.mxu0 0.0
        %612 = vmatpush1.msra.mxu0 0.0
        %613 = vmatprep.subr.mxu0 0.0
        %614 = vmatpush1.msra.mxu0 0.0
        %615 = vmatprep.subr.mxu0 0.0
        %616 = vmatpush1.msra.mxu0 0.0
        %617 = vmatprep.subr.mxu0 0.0
        %618 = vmatpush1.msra.mxu0 0.0
        %619 = vmatprep.subr.mxu0 0.0
        %620 = vmatpush1.msra.mxu0 0.0
        %621 = vmatprep.mubr.f32.mxu0 0.0
        %622 = vmatmul.mubr.f32.gmra.mrb[0].mxu0 %v555
        %v623 = vpop.f32.mrb[0].mxu0
        %v624 = vadd.f32 %v552, %v623
        %v625 = vpop.f32.mrb[0].mxu0
        %626 = vdwg.mxu0
        %627 = vmax.xlane.f32.xlu0 %v624
        %v628 = vpop.xlane.xlu0 %627
        %v629 = vsub.f32 %v624, %v628
        %v630 = vmul.f32 %v629, 1.442695
        %v631 = vpow.pop %v630
        %632 = vadd.xlane.f32.xlu0 %v631
        %v633 = vpop.xlane.xlu0 %632
        %v634 = vrcp.pop %v633
        %v635 = vmul.f32 %v440, %v634
        %v636 = vld [vmem:[#allocation2] sm:$0xff]
        %638 = vset.pattern.permute.xlu0 0
        %639 = vperm.xlu0 %638, %v635
        %v640 = vpop.permute.xlu0 %639
        %v642 = vmul.f32 %v631, %v640
        %v643 = vadd.f32 %v636, %v642
        %644 = vst [vmem:[#allocation2] sm:$0xff] %v643
        %645 = vrot.lane.b32.xlu0 %v541, 96
        %v646 = vpop.permute.xlu0 %645
        %v647 = vsel %vm359, %v646, 0
        %649 = vmatprep.subr.mxu0 0.0
        %650 = vmatpush1.msra.mxu0 %v542
        %651 = vmatprep.subr.mxu0 0.0
        %652 = vmatpush1.msra.mxu0 %v543
        %653 = vmatprep.subr.mxu0 0.0
        %654 = vmatpush1.msra.mxu0 %v544
        %655 = vmatprep.subr.mxu0 0.0
        %656 = vmatpush1.msra.mxu0 %v545
        %657 = vmatprep.subr.mxu0 0.0
        %658 = vmatpush1.msra.mxu0 0.0
        %659 = vmatprep.subr.mxu0 0.0
        %660 = vmatpush1.msra.mxu0 0.0
        %661 = vmatprep.subr.mxu0 0.0
        %662 = vmatpush1.msra.mxu0 0.0
        %663 = vmatprep.subr.mxu0 0.0
        %664 = vmatpush1.msra.mxu0 0.0
        %665 = vmatprep.subr.mxu0 0.0
        %666 = vmatpush1.msra.mxu0 0.0
        %667 = vmatprep.subr.mxu0 0.0
        %668 = vmatpush1.msra.mxu0 0.0
        %669 = vmatprep.subr.mxu0 0.0
        %670 = vmatpush1.msra.mxu0 0.0
        %671 = vmatprep.subr.mxu0 0.0
        %672 = vmatpush1.msra.mxu0 0.0
        %673 = vmatprep.subr.mxu0 0.0
        %674 = vmatpush1.msra.mxu0 0.0
        %675 = vmatprep.subr.mxu0 0.0
        %676 = vmatpush1.msra.mxu0 0.0
        %677 = vmatprep.subr.mxu0 0.0
        %678 = vmatpush1.msra.mxu0 0.0
        %679 = vmatprep.subr.mxu0 0.0
        %680 = vmatpush1.msra.mxu0 0.0
        %681 = vmatprep.subr.mxu0 0.0
        %682 = vmatpush1.msra.mxu0 0.0
        %683 = vmatprep.subr.mxu0 0.0
        %684 = vmatpush1.msra.mxu0 0.0
        %685 = vmatprep.subr.mxu0 0.0
        %686 = vmatpush1.msra.mxu0 0.0
        %687 = vmatprep.subr.mxu0 0.0
        %688 = vmatpush1.msra.mxu0 0.0
        %689 = vmatprep.subr.mxu0 0.0
        %690 = vmatpush1.msra.mxu0 0.0
        %691 = vmatprep.subr.mxu0 0.0
        %692 = vmatpush1.msra.mxu0 0.0
        %693 = vmatprep.subr.mxu0 0.0
        %694 = vmatpush1.msra.mxu0 0.0
        %695 = vmatprep.subr.mxu0 0.0
        %696 = vmatpush1.msra.mxu0 0.0
        %697 = vmatprep.subr.mxu0 0.0
        %698 = vmatpush1.msra.mxu0 0.0
        %699 = vmatprep.subr.mxu0 0.0
        %700 = vmatpush1.msra.mxu0 0.0
        %701 = vmatprep.subr.mxu0 0.0
        %702 = vmatpush1.msra.mxu0 0.0
        %703 = vmatprep.subr.mxu0 0.0
        %704 = vmatpush1.msra.mxu0 0.0
        %705 = vmatprep.subr.mxu0 0.0
        %706 = vmatpush1.msra.mxu0 0.0
        %707 = vmatprep.subr.mxu0 0.0
        %708 = vmatpush1.msra.mxu0 0.0
        %709 = vmatprep.subr.mxu0 0.0
        %710 = vmatpush1.msra.mxu0 0.0
        %711 = vmatprep.subr.mxu0 0.0
        %712 = vmatpush1.msra.mxu0 0.0
        %713 = vmatprep.mubr.f32.mxu0 0.0
        %714 = vmatmul.mubr.f32.gmra.mrb[0].mxu0 %v647
        %v715 = vpop.f32.mrb[0].mxu0
        %v716 = vadd.f32 %v552, %v715
        %v717 = vpop.f32.mrb[0].mxu0
        %718 = vdwg.mxu0
        %719 = vmax.xlane.f32.xlu0 %v716
        %v720 = vpop.xlane.xlu0 %719
        %v721 = vsub.f32 %v716, %v720
        %v722 = vmul.f32 %v721, 1.442695
        %v723 = vpow.pop %v722
        %724 = vadd.xlane.f32.xlu0 %v723
        %v725 = vpop.xlane.xlu0 %724
        %v726 = vrcp.pop %v725
        %v727 = vmul.f32 %v446, %v726
        %v728 = vld [vmem:[#allocation2] sm:$0xff]
        %730 = vset.pattern.permute.xlu0 0
        %731 = vperm.xlu0 %730, %v727
        %v732 = vpop.permute.xlu0 %731
        %v734 = vmul.f32 %v723, %v732
        %v735 = vadd.f32 %v728, %v734
        %736 = vst [vmem:[#allocation2] sm:$0xff] %v735
        %737 = vrot.lane.b32.xlu0 %v541, 64
        %v738 = vpop.permute.xlu0 %737
        %v739 = vsel %vm359, %v738, 0
        %741 = vmatprep.subr.mxu0 0.0
        %742 = vmatpush1.msra.mxu0 %v542
        %743 = vmatprep.subr.mxu0 0.0
        %744 = vmatpush1.msra.mxu0 %v543
        %745 = vmatprep.subr.mxu0 0.0
        %746 = vmatpush1.msra.mxu0 %v544
        %747 = vmatprep.subr.mxu0 0.0
        %748 = vmatpush1.msra.mxu0 %v545
        %749 = vmatprep.subr.mxu0 0.0
        %750 = vmatpush1.msra.mxu0 0.0
        %751 = vmatprep.subr.mxu0 0.0
        %752 = vmatpush1.msra.mxu0 0.0
        %753 = vmatprep.subr.mxu0 0.0
        %754 = vmatpush1.msra.mxu0 0.0
        %755 = vmatprep.subr.mxu0 0.0
        %756 = vmatpush1.msra.mxu0 0.0
        %757 = vmatprep.subr.mxu0 0.0
        %758 = vmatpush1.msra.mxu0 0.0
        %759 = vmatprep.subr.mxu0 0.0
        %760 = vmatpush1.msra.mxu0 0.0
        %761 = vmatprep.subr.mxu0 0.0
        %762 = vmatpush1.msra.mxu0 0.0
        %763 = vmatprep.subr.mxu0 0.0
        %764 = vmatpush1.msra.mxu0 0.0
        %765 = vmatprep.subr.mxu0 0.0
        %766 = vmatpush1.msra.mxu0 0.0
        %767 = vmatprep.subr.mxu0 0.0
        %768 = vmatpush1.msra.mxu0 0.0
        %769 = vmatprep.subr.mxu0 0.0
        %770 = vmatpush1.msra.mxu0 0.0
        %771 = vmatprep.subr.mxu0 0.0
        %772 = vmatpush1.msra.mxu0 0.0
        %773 = vmatprep.subr.mxu0 0.0
        %774 = vmatpush1.msra.mxu0 0.0
        %775 = vmatprep.subr.mxu0 0.0
        %776 = vmatpush1.msra.mxu0 0.0
        %777 = vmatprep.subr.mxu0 0.0
        %778 = vmatpush1.msra.mxu0 0.0
        %779 = vmatprep.subr.mxu0 0.0
        %780 = vmatpush1.msra.mxu0 0.0
        %781 = vmatprep.subr.mxu0 0.0
        %782 = vmatpush1.msra.mxu0 0.0
        %783 = vmatprep.subr.mxu0 0.0
        %784 = vmatpush1.msra.mxu0 0.0
        %785 = vmatprep.subr.mxu0 0.0
        %786 = vmatpush1.msra.mxu0 0.0
        %787 = vmatprep.subr.mxu0 0.0
        %788 = vmatpush1.msra.mxu0 0.0
        %789 = vmatprep.subr.mxu0 0.0
        %790 = vmatpush1.msra.mxu0 0.0
        %791 = vmatprep.subr.mxu0 0.0
        %792 = vmatpush1.msra.mxu0 0.0
        %793 = vmatprep.subr.mxu0 0.0
        %794 = vmatpush1.msra.mxu0 0.0
        %795 = vmatprep.subr.mxu0 0.0
        %796 = vmatpush1.msra.mxu0 0.0
        %797 = vmatprep.subr.mxu0 0.0
        %798 = vmatpush1.msra.mxu0 0.0
        %799 = vmatprep.subr.mxu0 0.0
        %800 = vmatpush1.msra.mxu0 0.0
        %801 = vmatprep.subr.mxu0 0.0
        %802 = vmatpush1.msra.mxu0 0.0
        %803 = vmatprep.subr.mxu0 0.0
        %804 = vmatpush1.msra.mxu0 0.0
        %805 = vmatprep.mubr.f32.mxu0 0.0
        %806 = vmatmul.mubr.f32.gmra.mrb[0].mxu0 %v739
        %v807 = vpop.f32.mrb[0].mxu0
        %v808 = vadd.f32 %v552, %v807
        %v809 = vpop.f32.mrb[0].mxu0
        %810 = vdwg.mxu0
        %811 = vmax.xlane.f32.xlu0 %v808
        %v812 = vpop.xlane.xlu0 %811
        %v813 = vsub.f32 %v808, %v812
        %v814 = vmul.f32 %v813, 1.442695
        %v815 = vpow.pop %v814
        %816 = vadd.xlane.f32.xlu0 %v815
        %v817 = vpop.xlane.xlu0 %816
        %v818 = vrcp.pop %v817
        %v819 = vmul.f32 %v455, %v818
        %v820 = vld [vmem:[#allocation2] sm:$0xff]
        %822 = vset.pattern.permute.xlu0 0
        %823 = vperm.xlu0 %822, %v819
        %v824 = vpop.permute.xlu0 %823
        %v826 = vmul.f32 %v815, %v824
        %v827 = vadd.f32 %v820, %v826
        %828 = vst [vmem:[#allocation2] sm:$0xff] %v827
        %829 = vrot.lane.b32.xlu0 %v541, 32
        %v830 = vpop.permute.xlu0 %829
        %v831 = vsel %vm359, %v830, 0
        %833 = vmatprep.subr.mxu0 0.0
        %834 = vmatpush1.msra.mxu0 %v542
        %835 = vmatprep.subr.mxu0 0.0
        %836 = vmatpush1.msra.mxu0 %v543
        %837 = vmatprep.subr.mxu0 0.0
        %838 = vmatpush1.msra.mxu0 %v544
        %839 = vmatprep.subr.mxu0 0.0
        %840 = vmatpush1.msra.mxu0 %v545
        %841 = vmatprep.subr.mxu0 0.0
        %842 = vmatpush1.msra.mxu0 0.0
        %843 = vmatprep.subr.mxu0 0.0
        %844 = vmatpush1.msra.mxu0 0.0
        %845 = vmatprep.subr.mxu0 0.0
        %846 = vmatpush1.msra.mxu0 0.0
        %847 = vmatprep.subr.mxu0 0.0
        %848 = vmatpush1.msra.mxu0 0.0
        %849 = vmatprep.subr.mxu0 0.0
        %850 = vmatpush1.msra.mxu0 0.0
        %851 = vmatprep.subr.mxu0 0.0
        %852 = vmatpush1.msra.mxu0 0.0
        %853 = vmatprep.subr.mxu0 0.0
        %854 = vmatpush1.msra.mxu0 0.0
        %855 = vmatprep.subr.mxu0 0.0
        %856 = vmatpush1.msra.mxu0 0.0
        %857 = vmatprep.subr.mxu0 0.0
        %858 = vmatpush1.msra.mxu0 0.0
        %859 = vmatprep.subr.mxu0 0.0
        %860 = vmatpush1.msra.mxu0 0.0
        %861 = vmatprep.subr.mxu0 0.0
        %862 = vmatpush1.msra.mxu0 0.0
        %863 = vmatprep.subr.mxu0 0.0
        %864 = vmatpush1.msra.mxu0 0.0
        %865 = vmatprep.subr.mxu0 0.0
        %866 = vmatpush1.msra.mxu0 0.0
        %867 = vmatprep.subr.mxu0 0.0
        %868 = vmatpush1.msra.mxu0 0.0
        %869 = vmatprep.subr.mxu0 0.0
        %870 = vmatpush1.msra.mxu0 0.0
        %871 = vmatprep.subr.mxu0 0.0
        %872 = vmatpush1.msra.mxu0 0.0
        %873 = vmatprep.subr.mxu0 0.0
        %874 = vmatpush1.msra.mxu0 0.0
        %875 = vmatprep.subr.mxu0 0.0
        %876 = vmatpush1.msra.mxu0 0.0
        %877 = vmatprep.subr.mxu0 0.0
        %878 = vmatpush1.msra.mxu0 0.0
        %879 = vmatprep.subr.mxu0 0.0
        %880 = vmatpush1.msra.mxu0 0.0
        %881 = vmatprep.subr.mxu0 0.0
        %882 = vmatpush1.msra.mxu0 0.0
        %883 = vmatprep.subr.mxu0 0.0
        %884 = vmatpush1.msra.mxu0 0.0
        %885 = vmatprep.subr.mxu0 0.0
        %886 = vmatpush1.msra.mxu0 0.0
        %887 = vmatprep.subr.mxu0 0.0
        %888 = vmatpush1.msra.mxu0 0.0
        %889 = vmatprep.subr.mxu0 0.0
        %890 = vmatpush1.msra.mxu0 0.0
        %891 = vmatprep.subr.mxu0 0.0
        %892 = vmatpush1.msra.mxu0 0.0
        %893 = vmatprep.subr.mxu0 0.0
        %894 = vmatpush1.msra.mxu0 0.0
        %895 = vmatprep.subr.mxu0 0.0
        %896 = vmatpush1.msra.mxu0 0.0
        %897 = vmatprep.mubr.f32.mxu0 0.0
        %898 = vmatmul.mubr.f32.gmra.mrb[0].mxu0 %v831
        %v899 = vpop.f32.mrb[0].mxu0
        %v900 = vadd.f32 %v552, %v899
        %v901 = vpop.f32.mrb[0].mxu0
        %902 = vdwg.mxu0
        %903 = vmax.xlane.f32.xlu0 %v900
        %v904 = vpop.xlane.xlu0 %903
        %v905 = vsub.f32 %v900, %v904
        %v906 = vmul.f32 %v905, 1.442695
        %v907 = vpow.pop %v906
        %908 = vadd.xlane.f32.xlu0 %v907
        %v909 = vpop.xlane.xlu0 %908
        %v910 = vrcp.pop %v909
        %v911 = vmul.f32 %v459, %v910
        %v912 = vld [vmem:[#allocation2] sm:$0xff]
        %914 = vset.pattern.permute.xlu0 0
        %915 = vperm.xlu0 %914, %v911
        %v916 = vpop.permute.xlu0 %915
        %v918 = vmul.f32 %v907, %v916
        %v919 = vadd.f32 %v912, %v918
        %920 = vst [vmem:[#allocation2] sm:$0xff] %v919
        %v921 = vld [vmem:[#allocation2] sm:$0xff]
        %922 = vst [vmem:[%s336] sm:$0xff] %v921
        %s923 = sand.u32 %s187, 1
        %s924 = scalar_lea.sflag [#allocation5], %s923
        %s925 = sand.u32 %s187, 1
        %s926 = smul.addr %s925, 8
        %s927 = scalar_lea.vmem [#allocation8], %s926
        %p928 = scmp.lt.s32.totalorder %s27, 1
        %s929 = scalar_select %p928, %s27, 1
        %s930 = smul.addr %s929, 8
        %s931 = scalar_lea.vmem %s8, %s930
        // Predicated region
        $region57: #{tpu_custom_call.1} parent=47 // pred_check
          %p932 = pneg %p197
        $region58: #{tpu_custom_call.1} parent=47 // pred_check_branch
          %934 = sbr.rel (%p932) target = $region60
        $region59: #{tpu_custom_call.1} parent=47 // pred_region
          %s936 = ssub.s32 128, 128
          %937 = vsyncadd %s924, %s936
          %s938 = smul.addr %s27, 128
          %s939 = scalar_lea.hbm %s7, %s938
          %s941 = sshll.u32 %s927, 4
          %s942 = int_to_ptr.vmem [resolvable:$true] %s941
          %944 = dma.vmem_to_hbm [thread:$0]  %s942, 128, %s939, %s924
        $region60: #{tpu_custom_call.1} parent=47 // pred_fallthru
          _
        // Predicated region
        $region61: #{tpu_custom_call.1} parent=47 // pred_check
          %p945 = pneg %p223
        $region62: #{tpu_custom_call.1} parent=47 // pred_check_branch
          %947 = sbr.rel (%p945) target = $region64
        $region63: #{tpu_custom_call.1} parent=47 // pred_region
          _
        $region64: #{tpu_custom_call.1} parent=47 // pred_fallthru
          _
      $region48: #{tpu_custom_call.1} parent=5 // pred_fallthru
        _
      %p948 = scmp.le.s32.totalorder 2, %s22
      // Predicated region
      $region65: #{tpu_custom_call.1} parent=5 // pred_check
        %p949 = pneg %p948
      $region66: #{tpu_custom_call.1} parent=5 // pred_check_branch
        %951 = sbr.rel (%p949) target = $region68
      $region67: #{tpu_custom_call.1} parent=5 // pred_region
        %s952 = ssub.s32 %s22, 2
        // Predicated region
        $region69: #{tpu_custom_call.1} parent=67 // pred_check
          %p953 = pneg %p203
        $region70: #{tpu_custom_call.1} parent=67 // pred_check_branch
          %955 = sbr.rel (%p953) target = $region72
        $region71: #{tpu_custom_call.1} parent=67 // pred_region
          %s956 = sand.u32 %s188, 1
          %s957 = scalar_lea.sflag [#allocation5], %s956
          %s958 = sand.u32 %s188, 1
          %s959 = smul.addr %s958, 8
          %s960 = scalar_lea.vmem [#allocation8], %s959
          %961 = dma.done %s957, 128
        $region72: #{tpu_custom_call.1} parent=67 // pred_fallthru
          _
        // Predicated region
        $region73: #{tpu_custom_call.1} parent=67 // pred_check
          %p962 = pneg %p229
        $region74: #{tpu_custom_call.1} parent=67 // pred_check_branch
          %964 = sbr.rel (%p962) target = $region76
        $region75: #{tpu_custom_call.1} parent=67 // pred_region
          %p965 = scmp.lt.s32.totalorder %s28, 1
          %s966 = scalar_select %p965, %s28, 1
          %s967 = smul.addr %s966, 8
          %s968 = scalar_lea.vmem %s8, %s967
        $region76: #{tpu_custom_call.1} parent=67 // pred_fallthru
          _
      $region68: #{tpu_custom_call.1} parent=5 // pred_fallthru
        _
    $region6: #{tpu_custom_call.1} parent=1 // loop_footer
      %s26 = sadd.s32 1, %s22
    $region7: #{tpu_custom_call.1} parent=1 // loop_footer_branch
      %21 = sbr.rel target = $region3
    $region8: #{tpu_custom_call.1} parent=1 // loop_exit
      _
    %969 = vsyncpa [#allocation4], 1
    %s970 = scalar_lea.sflag [#allocation4], 1
    %971 = vsyncpa %s970, 1
    %972 = vsyncpa [#allocation7], 1
    %973 = vsyncpa [#allocation5], 1
    %s974 = scalar_lea.sflag [#allocation5], 1
    %975 = vsyncpa %s974, 1

</llo_original>
